<compile_context>
chip_gen: v7x
topology: tpu7x:2x2x1
jax: 0.10.0
libtpu: 0.0.40
codegen_flags: <defaults>
</compile_context>

<pallas_src>
import functools

import numpy as np
import jax
import jax.numpy as jnp
from jax import lax
from jax.experimental import pallas as pl
from jax.experimental.pallas import tpu as pltpu

NEG_SLOPE = 0.01
PIXNORM_EPS = 1e-8
N_STYLE_SEGS = 4          # stacked latent-conv segments: [ysi0 | ybi0 | ysi1 | ybi1]


# ----------------------------- kernel helpers -----------------------------
def _shift_rows(h, off):
    """out[p, :] = h[(p + off) % HW, :] — static circular row shift."""
    hw = h.shape[0]
    o = off % hw
    if o == 0:
        return h
    return jnp.concatenate([h[o:, :], h[:o, :]], axis=0)


def _im2col3x3(h, mask_full, W):
    """(HW, C) f32 -> masked (HW, 9*C) bf16 patch matrix for a 3x3 'same' conv.

    Tap order k = ky*3 + kx matches the (9*Cin, Cout) weight row order; the
    precomputed full-width boundary mask emulates zero padding in one multiply
    (no per-tap (HW,1)->(HW,C) broadcasts).
    """
    blocks = []
    for ky in range(3):
        for kx in range(3):
            off = (ky - 1) * W + (kx - 1)
            blocks.append(_shift_rows(h, off))
    patches = jnp.concatenate(blocks, axis=1)            # (HW, 9*C), f32
    return (patches * mask_full).astype(jnp.bfloat16)


def _adain(h, ysi, ybi):
    """AdaIN as in the reference: per-pixel channel mean, global unbiased std
    (one-pass variance feeding rsqrt).  All f32 (v5e-friendly)."""
    mean_c = jnp.mean(h, axis=1, keepdims=True)           # torch.mean(x, dim=1), B == 1
    n = h.shape[0] * h.shape[1]
    mu = jnp.mean(h)
    msq = jnp.mean(h * h)
    var = (msq - mu * mu) * (n / (n - 1.0))               # torch.std(x), unbiased
    inv_std = lax.rsqrt(var)
    return ysi * ((h - mean_c) * inv_std) + ybi


def generator_kernel(x_ref, lat_ref, noise_ref, mask_ref,
                     w_lat_ref, b_lat_ref,
                     w_main_ref, b_main_ref,
                     w_rgb_ref, b_rgb_ref,
                     out_ref,
                     lat_patch_ref, styles_ref, *, W):
    t = pl.program_id(0)
    n_segs = pl.num_programs(0)

    # Build the latent im2col once; reused by all four style segments.
    @pl.when(t == 0)
    def _():
        lat_patch_ref[...] = _im2col3x3(lat_ref[...], mask_ref[...], W)

    # Style segment t: one (HW, 9*Clat) @ (9*Clat, Cout) bf16 dot, f32 accumulate.
    seg = jnp.dot(lat_patch_ref[...], w_lat_ref[...],
                  preferred_element_type=jnp.float32) + b_lat_ref[...]
    styles_ref[t] = seg

    # Finalize on the last step (all style segments now live in VMEM scratch).
    @pl.when(t == n_segs - 1)
    def _():
        x = x_ref[...]                                     # (HW, Cin) f32
        # FirstBlockG: PixelNorm2d(x) + noise
        h = x * lax.rsqrt(jnp.mean(x * x, axis=1, keepdims=True) + PIXNORM_EPS)
        h = h + noise_ref[...]
        # AdaIN #0
        h = _adain(h, styles_ref[0], styles_ref[1])
        # main: EqualizedLRConv2d 3x3 (im2col + single bf16 dot) -> LeakyReLU(0.01)
        patches = _im2col3x3(h, mask_ref[...], W)
        h = jnp.dot(patches, w_main_ref[...],
                    preferred_element_type=jnp.float32) + b_main_ref[...]
        h = jnp.maximum(h, NEG_SLOPE * h)
        # AdaIN #1
        h = _adain(h, styles_ref[2], styles_ref[3])
        # to_rgb (1x1 conv).  RGBAdd with a single RGB is the identity.
        rgb = jnp.dot(h.astype(jnp.bfloat16), w_rgb_ref[...],
                      preferred_element_type=jnp.float32) + b_rgb_ref[...]
        out_ref[...] = rgb


# ------------------------------ host-side glue -----------------------------
def build_boundary_mask(H, W, C):
    """mask[p, k*C + c] == 1 iff tap k of output pixel p reads inside the image."""
    m = np.zeros((H * W, 9), np.float32)
    for ky in range(3):
        for kx in range(3):
            k = ky * 3 + kx
            for y in range(H):
                for x in range(W):
                    ys, xs = y + ky - 1, x + kx - 1
                    if 0 <= ys < H and 0 <= xs < W:
                        m[y * W + x, k] = 1.0
    return jnp.asarray(np.repeat(m, C, axis=1))            # (HW, 9*C)


def flat_taps(w):
    """(Cout, Cin, 3, 3) -> (9*Cin, Cout); row index = (ky*3 + kx)*Cin + ci."""
    co, ci = w.shape[0], w.shape[1]
    return jnp.transpose(w, (2, 3, 1, 0)).reshape(9 * ci, co)


def init_params(key, cin, cout, clat):
    """Deterministic EqualizedLR params: N(0,1) weights * sqrt(2/fan_in), zero bias."""
    ks = jax.random.split(key, 6)

    def eq_conv3(k, ci, co):
        w = jax.random.normal(k, (co, ci, 3, 3), jnp.float32)
        return w * np.sqrt(2.0 / (ci * 9)).astype(np.float32)

    def eq_conv1(k, ci, co):
        w = jax.random.normal(k, (co, ci, 1, 1), jnp.float32)
        return w * np.sqrt(2.0 / ci).astype(np.float32)

    p = {}
    p["w_ysi0"] = eq_conv3(ks[0], clat, cout); p["b_ysi0"] = jnp.zeros((cout,), jnp.float32)
    p["w_ybi0"] = eq_conv3(ks[1], clat, cout); p["b_ybi0"] = jnp.zeros((cout,), jnp.float32)
    p["w_main"] = eq_conv3(ks[2], cin,  cout); p["b_main"] = jnp.zeros((cout,), jnp.float32)
    p["w_ysi1"] = eq_conv3(ks[3], clat, cout); p["b_ysi1"] = jnp.zeros((cout,), jnp.float32)
    p["w_ybi1"] = eq_conv3(ks[4], clat, cout); p["b_ybi1"] = jnp.zeros((cout,), jnp.float32)
    p["w_rgb"]  = eq_conv1(ks[5], cout, 3);    p["b_rgb"]  = jnp.zeros((3,), jnp.float32)
    return p


def generator_forward(x, latent, noise, params):
    B, cin, H, W = x.shape
    assert B == 1, "AdaIN mean broadcast in the reference module requires batch == 1"
    clat = latent.shape[1]
    cout = params["w_main"].shape[0]
    assert clat == cin, "module config uses 512 channels everywhere; shared boundary mask"
    assert cout % 128 == 0, "style segments / weight tiles must stay 128-lane aligned"
    HW = H * W

    mask = build_boundary_mask(H, W, cin)                   # (HW, 9*Cin) f32
    to_bf16 = lambda w: w.astype(jnp.bfloat16)

    # Fuse the 4 AdaIN latent convs; column segment j is grid step j's weight tile.
    w_lat = jnp.concatenate(
        [flat_taps(params["w_ysi0"]), flat_taps(params["w_ybi0"]),
         flat_taps(params["w_ysi1"]), flat_taps(params["w_ybi1"])], axis=1)
    b_lat = jnp.concatenate(
        [params["b_ysi0"], params["b_ybi0"], params["b_ysi1"], params["b_ybi1"]])

    args = (
        jnp.transpose(x[0].reshape(cin, HW)).astype(jnp.float32),        # (HW, Cin)
        jnp.transpose(latent[0].reshape(clat, HW)).astype(jnp.float32),  # (HW, Clat)
        noise.reshape(HW, 1).astype(jnp.float32),                        # (HW, 1)
        mask,                                                            # (HW, 9*Cin)
        to_bf16(w_lat),                                                  # (9*Clat, 4*Cout) bf16
        b_lat.reshape(1, N_STYLE_SEGS * cout).astype(jnp.float32),
        to_bf16(flat_taps(params["w_main"])),                            # (9*Cin, Cout) bf16
        params["b_main"].reshape(1, cout).astype(jnp.float32),
        to_bf16(params["w_rgb"].reshape(3, cout).T),                     # (Cout, 3) bf16
        params["b_rgb"].reshape(1, 3).astype(jnp.float32),
    )

    whole = lambda t: (0, 0)        # resident across the whole grid (index never changes)
    seg_tile = lambda t: (0, t)     # stream one Cout-wide style-segment tile per step

    grid_spec = pltpu.PrefetchScalarGridSpec(
        num_scalar_prefetch=0,
        grid=(N_STYLE_SEGS,),
        in_specs=[
            pl.BlockSpec((HW, cin), whole),                  # x
            pl.BlockSpec((HW, clat), whole),                 # latent
            pl.BlockSpec((HW, 1), whole),                    # noise
            pl.BlockSpec((HW, 9 * cin), whole),              # boundary mask (full width)
            pl.BlockSpec((9 * clat, cout), seg_tile),        # fused latent weight (streamed)
            pl.BlockSpec((1, cout), seg_tile),               # fused latent bias (streamed)
            pl.BlockSpec((9 * cin, cout), whole),            # main conv weight
            pl.BlockSpec((1, cout), whole),                  # main conv bias
            pl.BlockSpec((cout, 3), whole),                  # to_rgb weight
            pl.BlockSpec((1, 3), whole),                     # to_rgb bias
        ],
        out_specs=pl.BlockSpec((HW, 3), whole),
        scratch_shapes=[
            pltpu.VMEM((HW, 9 * clat), jnp.bfloat16),            # cached latent im2col
            pltpu.VMEM((N_STYLE_SEGS, HW, cout), jnp.float32),   # style segments
        ],
    )

    out = pl.pallas_call(
        functools.partial(generator_kernel, W=W),
        out_shape=jax.ShapeDtypeStruct((HW, 3), jnp.float32),
        grid_spec=grid_spec,
        compiler_params=pltpu.CompilerParams(
            dimension_semantics=("arbitrary",),    # finalize step depends on all segments
            vmem_limit_bytes=48 * 1024 * 1024),    # sized for C=512 with streamed w_lat
    )(*args)
    return jnp.transpose(out).reshape(1, 3, H, W)


# -------------------------- pure-JAX reference check ------------------------
def ref_forward(x, latent, noise, p):
    # Match the kernel's numerics: both conv operands quantized to bf16 with f32
    # accumulation; all elementwise math stays f32.
    qb = lambda a: a.astype(jnp.bfloat16)

    def conv(h, w, b, pad):
        out = lax.conv_general_dilated(
            qb(h), qb(w), (1, 1), ((pad, pad), (pad, pad)),
            dimension_numbers=("NCHW", "OIHW", "NCHW"),
            preferred_element_type=jnp.float32)
        return out + b[None, :, None, None]

    def adain(h, y, wys, bys, wyb, byb):
        ysi = conv(y, wys, bys, 1)
        ybi = conv(y, wyb, byb, 1)
        mean = jnp.mean(h, axis=1)                                    # (B, H, W)
        std = jnp.sqrt(jnp.sum((h - jnp.mean(h)) ** 2) / (h.size - 1))
        normalized = (h - mean) / std
        return ysi * normalized + ybi

    h = x / jnp.sqrt(jnp.mean(x * x, axis=1, keepdims=True) + PIXNORM_EPS)
    h = h + noise
    h = adain(h, latent, p["w_ysi0"], p["b_ysi0"], p["w_ybi0"], p["b_ybi0"])
    h = conv(h, p["w_main"], p["b_main"], 1)
    h = jnp.where(h > 0, h, NEG_SLOPE * h)
    h = adain(h, latent, p["w_ysi1"], p["b_ysi1"], p["w_ybi1"], p["b_ybi1"])
    return conv(h, p["w_rgb"], p["b_rgb"], 0)


if __name__ == "__main__":
    # Stand-in shapes: 128 channels (vs 512 in the module; keeps every style
    # segment / streamed weight tile 128-lane aligned), spatial 4x4 (the module's
    # const size).
    B, C, H, W = 1, 128, 4, 4
    key = jax.random.PRNGKey(0)
    k_x, k_lat, k_noise, k_p = jax.random.split(key, 4)
    x = jax.random.normal(k_x, (B, C, H, W), jnp.float32)         # synthesis input
    latent = jax.random.normal(k_lat, (B, C, H, W), jnp.float32)  # per-pixel latent map
    noise = jax.random.normal(k_noise, (B, 1, H, W), jnp.float32)
    params = init_params(k_p, C, C, C)

    out = generator_forward(x, latent, noise, params)
    out = jax.block_until_ready(out)

    ref = ref_forward(x, latent, noise, params)
    assert out.shape == (B, 3, H, W)
    np.testing.assert_allclose(np.asarray(out), np.asarray(ref), rtol=5e-3, atol=5e-3)
    print("KERNEL_OK")
</pallas_src>

<mosaic_0001>
module attributes {stable_mosaic.version = 11 : i64} {
  func.func @generator_kernel(%arg0: i32, %arg1: memref<16x128xf32, #tpu.memory_space<vmem>>, %arg2: memref<16x128xf32, #tpu.memory_space<vmem>>, %arg3: memref<16x1xf32, #tpu.memory_space<vmem>>, %arg4: memref<16x1152xf32, #tpu.memory_space<vmem>>, %arg5: memref<1152x128xbf16, #tpu.memory_space<vmem>>, %arg6: memref<1x128xf32, #tpu.memory_space<vmem>>, %arg7: memref<1152x128xbf16, #tpu.memory_space<vmem>>, %arg8: memref<1x128xf32, #tpu.memory_space<vmem>>, %arg9: memref<128x3xbf16, #tpu.memory_space<vmem>>, %arg10: memref<1x3xf32, #tpu.memory_space<vmem>>, %arg11: memref<16x3xf32, #tpu.memory_space<vmem>>, %arg12: memref<16x1152xbf16, #tpu.memory_space<vmem>>, %arg13: memref<4x16x128xf32, #tpu.memory_space<vmem>>) attributes {dimension_semantics = [#tpu.dimension_semantics<arbitrary>], iteration_bounds = array<i64: 4>, scalar_prefetch = 0 : i64, scratch_operands = 2 : i64, tpu.core_type = #tpu.core_type<tc>, window_params = [{pipeline_mode = #tpu.pipeline_mode<synchronous>, transform_indices = @transform_0, window_bounds = array<i64: 16, 128>}, {pipeline_mode = #tpu.pipeline_mode<synchronous>, transform_indices = @transform_1, window_bounds = array<i64: 16, 128>}, {pipeline_mode = #tpu.pipeline_mode<synchronous>, transform_indices = @transform_2, window_bounds = array<i64: 16, 1>}, {pipeline_mode = #tpu.pipeline_mode<synchronous>, transform_indices = @transform_3, window_bounds = array<i64: 16, 1152>}, {transform_indices = @transform_4, window_bounds = array<i64: 1152, 128>}, {transform_indices = @transform_5, window_bounds = array<i64: 1, 128>}, {pipeline_mode = #tpu.pipeline_mode<synchronous>, transform_indices = @transform_6, window_bounds = array<i64: 1152, 128>}, {pipeline_mode = #tpu.pipeline_mode<synchronous>, transform_indices = @transform_7, window_bounds = array<i64: 1, 128>}, {pipeline_mode = #tpu.pipeline_mode<synchronous>, transform_indices = @transform_8, window_bounds = array<i64: 128, 3>}, {pipeline_mode = #tpu.pipeline_mode<synchronous>, transform_indices = @transform_9, window_bounds = array<i64: 1, 3>}, {pipeline_mode = #tpu.pipeline_mode<synchronous>, transform_indices = @transform_10, window_bounds = array<i64: 16, 3>}]} {
    %c0_i32 = arith.constant 0 : i32
    %0 = arith.cmpi eq, %arg0, %c0_i32 : i32
    %1 = arith.extui %0 : i1 to i32
    %c0_i32_0 = arith.constant 0 : i32
    %2 = arith.cmpi ne, %1, %c0_i32_0 : i32
    scf.if %2 {
      %c0_9 = arith.constant 0 : index
      %c0_10 = arith.constant 0 : index
      %16 = vector.load %arg2[%c0_9, %c0_10] : memref<16x128xf32, #tpu.memory_space<vmem>>, vector<16x128xf32>
      %c0_11 = arith.constant 0 : index
      %c0_12 = arith.constant 0 : index
      %17 = vector.load %arg4[%c0_11, %c0_12] : memref<16x1152xf32, #tpu.memory_space<vmem>>, vector<16x1152xf32>
      %18 = vector.extract_strided_slice %16 {offsets = [11, 0], sizes = [5, 128], strides = [1, 1]} : vector<16x128xf32> to vector<5x128xf32>
      %19 = vector.extract_strided_slice %16 {offsets = [0, 0], sizes = [11, 128], strides = [1, 1]} : vector<16x128xf32> to vector<11x128xf32>
      %20 = tpu.concatenate %18, %19 in 0 : vector<5x128xf32>, vector<11x128xf32> -> vector<16x128xf32>
      %21 = vector.extract_strided_slice %16 {offsets = [12, 0], sizes = [4, 128], strides = [1, 1]} : vector<16x128xf32> to vector<4x128xf32>
      %22 = vector.extract_strided_slice %16 {offsets = [0, 0], sizes = [12, 128], strides = [1, 1]} : vector<16x128xf32> to vector<12x128xf32>
      %23 = tpu.concatenate %21, %22 in 0 : vector<4x128xf32>, vector<12x128xf32> -> vector<16x128xf32>
      %24 = vector.extract_strided_slice %16 {offsets = [13, 0], sizes = [3, 128], strides = [1, 1]} : vector<16x128xf32> to vector<3x128xf32>
      %25 = vector.extract_strided_slice %16 {offsets = [0, 0], sizes = [13, 128], strides = [1, 1]} : vector<16x128xf32> to vector<13x128xf32>
      %26 = tpu.concatenate %24, %25 in 0 : vector<3x128xf32>, vector<13x128xf32> -> vector<16x128xf32>
      %27 = vector.extract_strided_slice %16 {offsets = [15, 0], sizes = [1, 128], strides = [1, 1]} : vector<16x128xf32> to vector<1x128xf32>
      %28 = vector.extract_strided_slice %16 {offsets = [0, 0], sizes = [15, 128], strides = [1, 1]} : vector<16x128xf32> to vector<15x128xf32>
      %29 = tpu.concatenate %27, %28 in 0 : vector<1x128xf32>, vector<15x128xf32> -> vector<16x128xf32>
      %30 = vector.extract_strided_slice %16 {offsets = [1, 0], sizes = [15, 128], strides = [1, 1]} : vector<16x128xf32> to vector<15x128xf32>
      %31 = vector.extract_strided_slice %16 {offsets = [0, 0], sizes = [1, 128], strides = [1, 1]} : vector<16x128xf32> to vector<1x128xf32>
      %32 = tpu.concatenate %30, %31 in 0 : vector<15x128xf32>, vector<1x128xf32> -> vector<16x128xf32>
      %33 = vector.extract_strided_slice %16 {offsets = [3, 0], sizes = [13, 128], strides = [1, 1]} : vector<16x128xf32> to vector<13x128xf32>
      %34 = vector.extract_strided_slice %16 {offsets = [0, 0], sizes = [3, 128], strides = [1, 1]} : vector<16x128xf32> to vector<3x128xf32>
      %35 = tpu.concatenate %33, %34 in 0 : vector<13x128xf32>, vector<3x128xf32> -> vector<16x128xf32>
      %36 = vector.extract_strided_slice %16 {offsets = [4, 0], sizes = [12, 128], strides = [1, 1]} : vector<16x128xf32> to vector<12x128xf32>
      %37 = vector.extract_strided_slice %16 {offsets = [0, 0], sizes = [4, 128], strides = [1, 1]} : vector<16x128xf32> to vector<4x128xf32>
      %38 = tpu.concatenate %36, %37 in 0 : vector<12x128xf32>, vector<4x128xf32> -> vector<16x128xf32>
      %39 = vector.extract_strided_slice %16 {offsets = [5, 0], sizes = [11, 128], strides = [1, 1]} : vector<16x128xf32> to vector<11x128xf32>
      %40 = vector.extract_strided_slice %16 {offsets = [0, 0], sizes = [5, 128], strides = [1, 1]} : vector<16x128xf32> to vector<5x128xf32>
      %41 = tpu.concatenate %39, %40 in 0 : vector<11x128xf32>, vector<5x128xf32> -> vector<16x128xf32>
      %42 = tpu.concatenate %20, %23, %26, %29, %16, %32, %35, %38, %41 in 1 : vector<16x128xf32>, vector<16x128xf32>, vector<16x128xf32>, vector<16x128xf32>, vector<16x128xf32>, vector<16x128xf32>, vector<16x128xf32>, vector<16x128xf32>, vector<16x128xf32> -> vector<16x1152xf32>
      %43 = arith.mulf %42, %17 : vector<16x1152xf32>
      %44 = arith.truncf %43 : vector<16x1152xf32> to vector<16x1152xbf16>
      %c0_13 = arith.constant 0 : index
      %c0_14 = arith.constant 0 : index
      %45 = vector.load %arg12[%c0_13, %c0_14] : memref<16x1152xbf16, #tpu.memory_space<vmem>>, vector<16x1152xbf16>
      tpu.vector_store %arg12[%c0_13, %c0_14], %44 {strides = array<i32>} : memref<16x1152xbf16, #tpu.memory_space<vmem>>, vector<16x1152xbf16>,
    } else {
    }
    %c0 = arith.constant 0 : index
    %c0_1 = arith.constant 0 : index
    %3 = vector.load %arg12[%c0, %c0_1] : memref<16x1152xbf16, #tpu.memory_space<vmem>>, vector<16x1152xbf16>
    %c0_2 = arith.constant 0 : index
    %c0_3 = arith.constant 0 : index
    %4 = vector.load %arg5[%c0_2, %c0_3] : memref<1152x128xbf16, #tpu.memory_space<vmem>>, vector<1152x128xbf16>
    %cst = arith.constant dense<0.000000e+00> : vector<16x128xf32>
    %5 = tpu.matmul %3, %4, %cst {dimension_numbers = #tpu.dot_dimension_numbers<[1], [0], [0], [1], [0, 0, 1, 1], [], []>} : vector<16x1152xbf16>, vector<1152x128xbf16>, vector<16x128xf32> -> vector<16x128xf32>
    %c0_4 = arith.constant 0 : index
    %c0_5 = arith.constant 0 : index
    %6 = vector.load %arg6[%c0_4, %c0_5] : memref<1x128xf32, #tpu.memory_space<vmem>>, vector<1x128xf32>
    %7 = vector.broadcast %6 : vector<1x128xf32> to vector<16x128xf32>
    %8 = arith.addf %5, %7 : vector<16x128xf32>
    %9 = arith.index_cast %arg0 : i32 to index
    %c0_6 = arith.constant 0 : index
    %c0_7 = arith.constant 0 : index
    %10 = vector.load %arg13[%9, %c0_6, %c0_7] : memref<4x16x128xf32, #tpu.memory_space<vmem>>, vector<1x16x128xf32>
    %11 = vector.shape_cast %10 : vector<1x16x128xf32> to vector<16x128xf32>
    %12 = vector.shape_cast %8 : vector<16x128xf32> to vector<1x16x128xf32>
    tpu.vector_store %arg13[%9, %c0_6, %c0_7], %12 {strides = array<i32>} : memref<4x16x128xf32, #tpu.memory_space<vmem>>, vector<1x16x128xf32>,
    %c3_i32 = arith.constant 3 : i32
    %13 = arith.cmpi eq, %arg0, %c3_i32 : i32
    %14 = arith.extui %13 : i1 to i32
    %c0_i32_8 = arith.constant 0 : i32
    %15 = arith.cmpi ne, %14, %c0_i32_8 : i32
    scf.if %15 {
      %c0_9 = arith.constant 0 : index
      %c0_10 = arith.constant 0 : index
      %16 = vector.load %arg1[%c0_9, %c0_10] : memref<16x128xf32, #tpu.memory_space<vmem>>, vector<16x128xf32>
      %17 = arith.mulf %16, %16 : vector<16x128xf32>
      %cst_11 = arith.constant dense<0.000000e+00> : vector<16xf32>
      %18 = vector.multi_reduction <add>, %17, %cst_11 [1] : vector<16x128xf32> to vector<16xf32>
      %19 = vector.shape_cast %18 : vector<16xf32> to vector<16x1xf32>
      %cst_12 = arith.constant 1.280000e+02 : f32
      %20 = vector.broadcast %cst_12 : f32 to vector<16x1xf32>
      %21 = arith.divf %19, %20 : vector<16x1xf32>
      %cst_13 = arith.constant 9.99999993E-9 : f32
      %22 = vector.broadcast %cst_13 : f32 to vector<16x1xf32>
      %23 = arith.addf %21, %22 : vector<16x1xf32>
      %24 = math.rsqrt %23 : vector<16x1xf32>
      %25 = vector.broadcast %24 : vector<16x1xf32> to vector<16x128xf32>
      %26 = arith.mulf %16, %25 : vector<16x128xf32>
      %c0_14 = arith.constant 0 : index
      %c0_15 = arith.constant 0 : index
      %27 = vector.load %arg3[%c0_14, %c0_15] : memref<16x1xf32, #tpu.memory_space<vmem>>, vector<16x1xf32>
      %28 = vector.broadcast %27 : vector<16x1xf32> to vector<16x128xf32>
      %29 = arith.addf %26, %28 : vector<16x128xf32>
      %c0_16 = arith.constant 0 : index
      %c0_17 = arith.constant 0 : index
      %c0_18 = arith.constant 0 : index
      %30 = vector.load %arg13[%c0_16, %c0_17, %c0_18] : memref<4x16x128xf32, #tpu.memory_space<vmem>>, vector<1x16x128xf32>
      %31 = vector.shape_cast %30 : vector<1x16x128xf32> to vector<16x128xf32>
      %c1 = arith.constant 1 : index
      %c0_19 = arith.constant 0 : index
      %c0_20 = arith.constant 0 : index
      %32 = vector.load %arg13[%c1, %c0_19, %c0_20] : memref<4x16x128xf32, #tpu.memory_space<vmem>>, vector<1x16x128xf32>
      %33 = vector.shape_cast %32 : vector<1x16x128xf32> to vector<16x128xf32>
      %cst_21 = arith.constant dense<0.000000e+00> : vector<16xf32>
      %34 = vector.multi_reduction <add>, %29, %cst_21 [1] : vector<16x128xf32> to vector<16xf32>
      %35 = vector.shape_cast %34 : vector<16xf32> to vector<16x1xf32>
      %cst_22 = arith.constant 1.280000e+02 : f32
      %36 = vector.broadcast %cst_22 : f32 to vector<16x1xf32>
      %37 = arith.divf %35, %36 : vector<16x1xf32>
      %38 = vector.shape_cast %29 : vector<16x128xf32> to vector<1x16x128xf32>
      %cst_23 = arith.constant dense<0.000000e+00> : vector<1xf32>
      %39 = vector.multi_reduction <add>, %38, %cst_23 [1, 2] : vector<1x16x128xf32> to vector<1xf32>
      %40 = vector.shape_cast %39 : vector<1xf32> to vector<1x1x1xf32>
      %41 = vector.extract %40[0, 0, 0] : f32 from vector<1x1x1xf32>
      %cst_24 = arith.constant 2.048000e+03 : f32
      %42 = arith.divf %41, %cst_24 : f32
      %43 = arith.mulf %29, %29 : vector<16x128xf32>
      %44 = vector.shape_cast %43 : vector<16x128xf32> to vector<1x16x128xf32>
      %cst_25 = arith.constant dense<0.000000e+00> : vector<1xf32>
      %45 = vector.multi_reduction <add>, %44, %cst_25 [1, 2] : vector<1x16x128xf32> to vector<1xf32>
      %46 = vector.shape_cast %45 : vector<1xf32> to vector<1x1x1xf32>
      %47 = vector.extract %46[0, 0, 0] : f32 from vector<1x1x1xf32>
      %cst_26 = arith.constant 2.048000e+03 : f32
      %48 = arith.divf %47, %cst_26 : f32
      %49 = arith.mulf %42, %42 : f32
      %50 = arith.subf %48, %49 : f32
      %cst_27 = arith.constant 1.00048852 : f32
      %51 = arith.mulf %50, %cst_27 : f32
      %52 = math.rsqrt %51 : f32
      %53 = vector.broadcast %37 : vector<16x1xf32> to vector<16x128xf32>
      %54 = arith.subf %29, %53 : vector<16x128xf32>
      %55 = vector.broadcast %52 : f32 to vector<16x128xf32>
      %56 = arith.mulf %54, %55 : vector<16x128xf32>
      %57 = arith.mulf %31, %56 : vector<16x128xf32>
      %58 = arith.addf %57, %33 : vector<16x128xf32>
      %c0_28 = arith.constant 0 : index
      %c0_29 = arith.constant 0 : index
      %59 = vector.load %arg4[%c0_28, %c0_29] : memref<16x1152xf32, #tpu.memory_space<vmem>>, vector<16x1152xf32>
      %60 = vector.extract_strided_slice %58 {offsets = [11, 0], sizes = [5, 128], strides = [1, 1]} : vector<16x128xf32> to vector<5x128xf32>
      %61 = vector.extract_strided_slice %58 {offsets = [0, 0], sizes = [11, 128], strides = [1, 1]} : vector<16x128xf32> to vector<11x128xf32>
      %62 = tpu.concatenate %60, %61 in 0 : vector<5x128xf32>, vector<11x128xf32> -> vector<16x128xf32>
      %63 = vector.extract_strided_slice %58 {offsets = [12, 0], sizes = [4, 128], strides = [1, 1]} : vector<16x128xf32> to vector<4x128xf32>
      %64 = vector.extract_strided_slice %58 {offsets = [0, 0], sizes = [12, 128], strides = [1, 1]} : vector<16x128xf32> to vector<12x128xf32>
      %65 = tpu.concatenate %63, %64 in 0 : vector<4x128xf32>, vector<12x128xf32> -> vector<16x128xf32>
      %66 = vector.extract_strided_slice %58 {offsets = [13, 0], sizes = [3, 128], strides = [1, 1]} : vector<16x128xf32> to vector<3x128xf32>
      %67 = vector.extract_strided_slice %58 {offsets = [0, 0], sizes = [13, 128], strides = [1, 1]} : vector<16x128xf32> to vector<13x128xf32>
      %68 = tpu.concatenate %66, %67 in 0 : vector<3x128xf32>, vector<13x128xf32> -> vector<16x128xf32>
      %69 = vector.extract_strided_slice %58 {offsets = [15, 0], sizes = [1, 128], strides = [1, 1]} : vector<16x128xf32> to vector<1x128xf32>
      %70 = vector.extract_strided_slice %58 {offsets = [0, 0], sizes = [15, 128], strides = [1, 1]} : vector<16x128xf32> to vector<15x128xf32>
      %71 = tpu.concatenate %69, %70 in 0 : vector<1x128xf32>, vector<15x128xf32> -> vector<16x128xf32>
      %72 = vector.extract_strided_slice %58 {offsets = [1, 0], sizes = [15, 128], strides = [1, 1]} : vector<16x128xf32> to vector<15x128xf32>
      %73 = vector.extract_strided_slice %58 {offsets = [0, 0], sizes = [1, 128], strides = [1, 1]} : vector<16x128xf32> to vector<1x128xf32>
      %74 = tpu.concatenate %72, %73 in 0 : vector<15x128xf32>, vector<1x128xf32> -> vector<16x128xf32>
      %75 = vector.extract_strided_slice %58 {offsets = [3, 0], sizes = [13, 128], strides = [1, 1]} : vector<16x128xf32> to vector<13x128xf32>
      %76 = vector.extract_strided_slice %58 {offsets = [0, 0], sizes = [3, 128], strides = [1, 1]} : vector<16x128xf32> to vector<3x128xf32>
      %77 = tpu.concatenate %75, %76 in 0 : vector<13x128xf32>, vector<3x128xf32> -> vector<16x128xf32>
      %78 = vector.extract_strided_slice %58 {offsets = [4, 0], sizes = [12, 128], strides = [1, 1]} : vector<16x128xf32> to vector<12x128xf32>
      %79 = vector.extract_strided_slice %58 {offsets = [0, 0], sizes = [4, 128], strides = [1, 1]} : vector<16x128xf32> to vector<4x128xf32>
      %80 = tpu.concatenate %78, %79 in 0 : vector<12x128xf32>, vector<4x128xf32> -> vector<16x128xf32>
      %81 = vector.extract_strided_slice %58 {offsets = [5, 0], sizes = [11, 128], strides = [1, 1]} : vector<16x128xf32> to vector<11x128xf32>
      %82 = vector.extract_strided_slice %58 {offsets = [0, 0], sizes = [5, 128], strides = [1, 1]} : vector<16x128xf32> to vector<5x128xf32>
      %83 = tpu.concatenate %81, %82 in 0 : vector<11x128xf32>, vector<5x128xf32> -> vector<16x128xf32>
      %84 = tpu.concatenate %62, %65, %68, %71, %58, %74, %77, %80, %83 in 1 : vector<16x128xf32>, vector<16x128xf32>, vector<16x128xf32>, vector<16x128xf32>, vector<16x128xf32>, vector<16x128xf32>, vector<16x128xf32>, vector<16x128xf32>, vector<16x128xf32> -> vector<16x1152xf32>
      %85 = arith.mulf %84, %59 : vector<16x1152xf32>
      %86 = arith.truncf %85 : vector<16x1152xf32> to vector<16x1152xbf16>
      %c0_30 = arith.constant 0 : index
      %c0_31 = arith.constant 0 : index
      %87 = vector.load %arg7[%c0_30, %c0_31] : memref<1152x128xbf16, #tpu.memory_space<vmem>>, vector<1152x128xbf16>
      %cst_32 = arith.constant dense<0.000000e+00> : vector<16x128xf32>
      %88 = tpu.matmul %86, %87, %cst_32 {dimension_numbers = #tpu.dot_dimension_numbers<[1], [0], [0], [1], [0, 0, 1, 1], [], []>} : vector<16x1152xbf16>, vector<1152x128xbf16>, vector<16x128xf32> -> vector<16x128xf32>
      %c0_33 = arith.constant 0 : index
      %c0_34 = arith.constant 0 : index
      %89 = vector.load %arg8[%c0_33, %c0_34] : memref<1x128xf32, #tpu.memory_space<vmem>>, vector<1x128xf32>
      %90 = vector.broadcast %89 : vector<1x128xf32> to vector<16x128xf32>
      %91 = arith.addf %88, %90 : vector<16x128xf32>
      %cst_35 = arith.constant 0.00999999977 : f32
      %92 = vector.broadcast %cst_35 : f32 to vector<16x128xf32>
      %93 = arith.mulf %92, %91 : vector<16x128xf32>
      %94 = arith.maximumf %91, %93 : vector<16x128xf32>
      %c2 = arith.constant 2 : index
      %c0_36 = arith.constant 0 : index
      %c0_37 = arith.constant 0 : index
      %95 = vector.load %arg13[%c2, %c0_36, %c0_37] : memref<4x16x128xf32, #tpu.memory_space<vmem>>, vector<1x16x128xf32>
      %96 = vector.shape_cast %95 : vector<1x16x128xf32> to vector<16x128xf32>
      %c3 = arith.constant 3 : index
      %c0_38 = arith.constant 0 : index
      %c0_39 = arith.constant 0 : index
      %97 = vector.load %arg13[%c3, %c0_38, %c0_39] : memref<4x16x128xf32, #tpu.memory_space<vmem>>, vector<1x16x128xf32>
      %98 = vector.shape_cast %97 : vector<1x16x128xf32> to vector<16x128xf32>
      %cst_40 = arith.constant dense<0.000000e+00> : vector<16xf32>
      %99 = vector.multi_reduction <add>, %94, %cst_40 [1] : vector<16x128xf32> to vector<16xf32>
      %100 = vector.shape_cast %99 : vector<16xf32> to vector<16x1xf32>
      %cst_41 = arith.constant 1.280000e+02 : f32
      %101 = vector.broadcast %cst_41 : f32 to vector<16x1xf32>
      %102 = arith.divf %100, %101 : vector<16x1xf32>
      %103 = vector.shape_cast %94 : vector<16x128xf32> to vector<1x16x128xf32>
      %cst_42 = arith.constant dense<0.000000e+00> : vector<1xf32>
      %104 = vector.multi_reduction <add>, %103, %cst_42 [1, 2] : vector<1x16x128xf32> to vector<1xf32>
      %105 = vector.shape_cast %104 : vector<1xf32> to vector<1x1x1xf32>
      %106 = vector.extract %105[0, 0, 0] : f32 from vector<1x1x1xf32>
      %cst_43 = arith.constant 2.048000e+03 : f32
      %107 = arith.divf %106, %cst_43 : f32
      %108 = arith.mulf %94, %94 : vector<16x128xf32>
      %109 = vector.shape_cast %108 : vector<16x128xf32> to vector<1x16x128xf32>
      %cst_44 = arith.constant dense<0.000000e+00> : vector<1xf32>
      %110 = vector.multi_reduction <add>, %109, %cst_44 [1, 2] : vector<1x16x128xf32> to vector<1xf32>
      %111 = vector.shape_cast %110 : vector<1xf32> to vector<1x1x1xf32>
      %112 = vector.extract %111[0, 0, 0] : f32 from vector<1x1x1xf32>
      %cst_45 = arith.constant 2.048000e+03 : f32
      %113 = arith.divf %112, %cst_45 : f32
      %114 = arith.mulf %107, %107 : f32
      %115 = arith.subf %113, %114 : f32
      %cst_46 = arith.constant 1.00048852 : f32
      %116 = arith.mulf %115, %cst_46 : f32
      %117 = math.rsqrt %116 : f32
      %118 = vector.broadcast %102 : vector<16x1xf32> to vector<16x128xf32>
      %119 = arith.subf %94, %118 : vector<16x128xf32>
      %120 = vector.broadcast %117 : f32 to vector<16x128xf32>
      %121 = arith.mulf %119, %120 : vector<16x128xf32>
      %122 = arith.mulf %96, %121 : vector<16x128xf32>
      %123 = arith.addf %122, %98 : vector<16x128xf32>
      %124 = arith.truncf %123 : vector<16x128xf32> to vector<16x128xbf16>
      %c0_47 = arith.constant 0 : index
      %c0_48 = arith.constant 0 : index
      %125 = vector.load %arg9[%c0_47, %c0_48] : memref<128x3xbf16, #tpu.memory_space<vmem>>, vector<128x3xbf16>
      %cst_49 = arith.constant dense<0.000000e+00> : vector<16x3xf32>
      %126 = tpu.matmul %124, %125, %cst_49 {dimension_numbers = #tpu.dot_dimension_numbers<[1], [0], [0], [1], [0, 0, 1, 1], [], []>} : vector<16x128xbf16>, vector<128x3xbf16>, vector<16x3xf32> -> vector<16x3xf32>
      %c0_50 = arith.constant 0 : index
      %c0_51 = arith.constant 0 : index
      %127 = vector.load %arg10[%c0_50, %c0_51] : memref<1x3xf32, #tpu.memory_space<vmem>>, vector<1x3xf32>
      %128 = vector.broadcast %127 : vector<1x3xf32> to vector<16x3xf32>
      %129 = arith.addf %126, %128 : vector<16x3xf32>
      %c0_52 = arith.constant 0 : index
      %c0_53 = arith.constant 0 : index
      %130 = vector.load %arg11[%c0_52, %c0_53] : memref<16x3xf32, #tpu.memory_space<vmem>>, vector<16x3xf32>
      tpu.vector_store %arg11[%c0_52, %c0_53], %129 {strides = array<i32>} : memref<16x3xf32, #tpu.memory_space<vmem>>, vector<16x3xf32>,
    } else {
    }
    return
  }
  func.func @transform_0(%arg0: i32) -> (i32, i32) {
    %c0_i32 = arith.constant 0 : i32
    %c0_i32_0 = arith.constant 0 : i32
    %c0_i32_1 = arith.constant 0 : i32
    return %c0_i32, %c0_i32_0 : i32, i32
  }
  func.func @transform_1(%arg0: i32) -> (i32, i32) {
    %c0_i32 = arith.constant 0 : i32
    %c0_i32_0 = arith.constant 0 : i32
    %c0_i32_1 = arith.constant 0 : i32
    return %c0_i32, %c0_i32_0 : i32, i32
  }
  func.func @transform_2(%arg0: i32) -> (i32, i32) {
    %c0_i32 = arith.constant 0 : i32
    %c0_i32_0 = arith.constant 0 : i32
    %c0_i32_1 = arith.constant 0 : i32
    return %c0_i32, %c0_i32_0 : i32, i32
  }
  func.func @transform_3(%arg0: i32) -> (i32, i32) {
    %c0_i32 = arith.constant 0 : i32
    %c0_i32_0 = arith.constant 0 : i32
    %c0_i32_1 = arith.constant 0 : i32
    return %c0_i32, %c0_i32_0 : i32, i32
  }
  func.func @transform_4(%arg0: i32) -> (i32, i32) {
    %c0_i32 = arith.constant 0 : i32
    %c0_i32_0 = arith.constant 0 : i32
    return %c0_i32, %arg0 : i32, i32
  }
  func.func @transform_5(%arg0: i32) -> (i32, i32) {
    %c0_i32 = arith.constant 0 : i32
    %c0_i32_0 = arith.constant 0 : i32
    return %c0_i32, %arg0 : i32, i32
  }
  func.func @transform_6(%arg0: i32) -> (i32, i32) {
    %c0_i32 = arith.constant 0 : i32
    %c0_i32_0 = arith.constant 0 : i32
    %c0_i32_1 = arith.constant 0 : i32
    return %c0_i32, %c0_i32_0 : i32, i32
  }
  func.func @transform_7(%arg0: i32) -> (i32, i32) {
    %c0_i32 = arith.constant 0 : i32
    %c0_i32_0 = arith.constant 0 : i32
    %c0_i32_1 = arith.constant 0 : i32
    return %c0_i32, %c0_i32_0 : i32, i32
  }
  func.func @transform_8(%arg0: i32) -> (i32, i32) {
    %c0_i32 = arith.constant 0 : i32
    %c0_i32_0 = arith.constant 0 : i32
    %c0_i32_1 = arith.constant 0 : i32
    return %c0_i32, %c0_i32_0 : i32, i32
  }
  func.func @transform_9(%arg0: i32) -> (i32, i32) {
    %c0_i32 = arith.constant 0 : i32
    %c0_i32_0 = arith.constant 0 : i32
    %c0_i32_1 = arith.constant 0 : i32
    return %c0_i32, %c0_i32_0 : i32, i32
  }
  func.func @transform_10(%arg0: i32) -> (i32, i32) {
    %c0_i32 = arith.constant 0 : i32
    %c0_i32_0 = arith.constant 0 : i32
    %c0_i32_1 = arith.constant 0 : i32
    return %c0_i32, %c0_i32_0 : i32, i32
  }
}

</mosaic_0001>

<llo_original>
// kernel: tpu_custom_call.1
$region0: #{tpu_custom_call.1}
  #allocation0 [shape = 'u32[]', space=smem, size = 0x4, offset = 0x4, fixed_abs, tag = 'smem constant byte address 0x4 - core index']
  #allocation1 [shape = 'u32[144,128]{1,0:T(1,128)}', space=vmem, size = 0x12000, scoped, tag = 'internal scratch']
  #allocation2 [shape = 'bf16[16,1152]{1,0:T(16,128)(2,1)}', space=vmem, size = 0x9000, scoped, tag = 'scratch operand']
  #allocation3 [shape = 'f32[4,16,128]{2,1,0:T(8,128)}', space=vmem, size = 0x8000, scoped, tag = 'scratch operand']
  %s0 = inlined_call_operand.hbm [shape: f32[16,128], index: 0, kind: input, shape index: {}]
  %s1 = inlined_call_operand.hbm [shape: f32[16,128], index: 1, kind: input, shape index: {}]
  %s2 = inlined_call_operand.vmem [shape: f32[16,1], index: 2, kind: input, shape index: {}]
  %s3 = inlined_call_operand.hbm [shape: f32[16,1152], index: 3, kind: input, shape index: {}]
  %s4 = inlined_call_operand.hbm [shape: bf16[1152,512], index: 4, kind: input, shape index: {}]
  %s5 = inlined_call_operand.hbm [shape: f32[1,512], index: 5, kind: input, shape index: {}]
  %s6 = inlined_call_operand.hbm [shape: bf16[1152,128], index: 6, kind: input, shape index: {}]
  %s7 = inlined_call_operand.hbm [shape: f32[1,128], index: 7, kind: input, shape index: {}]
  %s8 = inlined_call_operand.vmem [shape: bf16[128,3], index: 8, kind: input, shape index: {}]
  %s9 = inlined_call_operand.hbm [shape: f32[1,3], index: 9, kind: input, shape index: {}]
  %s10 = inlined_call_operand.vmem [shape: f32[16,3], index: 10, kind: output, shape index: {}]
  %s11 = sld [smem:[#allocation0]]
  $region113: #{tpu_custom_call.1} parent=0
    _
  %s13 = ssub.s32 1, %s11
  %s14 = scalar_select 0, %s13, %s11
  $region1: #{tpu_custom_call.1} parent=0
    #allocation4 [shape = 'u8[8192]{0}', space=vmem, size = 0x2000, scoped, tag = 'input window, operand 0, single buffered']
    #allocation5 [shape = 's32[2]{0}', space=sflag, size = 0x8, scoped, tag = 'scoped memory for tpu_custom_call.1']
    #allocation6 [shape = 'u8[8192]{0}', space=vmem, size = 0x2000, scoped, tag = 'input window, operand 1, single buffered']
    #allocation7 [shape = 's32[1]{0}', space=sflag, size = 0x4, scoped, tag = 'scoped memory for tpu_custom_call.1']
    #allocation8 [shape = 'u8[73728]{0}', space=vmem, size = 0x12000, scoped, tag = 'input window, operand 3, single buffered']
    #allocation9 [shape = 'u8[589824]{0}', space=vmem, size = 0x90000, scoped, tag = 'input window, operand 4']
    #allocation10 [shape = 's32[2]{0}', space=sflag, size = 0x8, scoped, tag = 'scoped memory for tpu_custom_call.1']
    #allocation11 [shape = 'u8[1024]{0}', space=vmem, size = 0x400, scoped, tag = 'input window, operand 5']
    #allocation12 [shape = 'u8[294912]{0}', space=vmem, size = 0x48000, scoped, tag = 'input window, operand 6, single buffered']
    #allocation13 [shape = 's32[1]{0}', space=sflag, size = 0x4, scoped, tag = 'scoped memory for tpu_custom_call.1']
    #allocation14 [shape = 'u8[512]{0}', space=vmem, size = 0x400, scoped, tag = 'input window, operand 7, single buffered']
    #allocation15 [shape = 'u8[512]{0}', space=vmem, size = 0x400, scoped, tag = 'input window, operand 9, single buffered']
    #allocation16 [shape = 's32[1]{0}', space=sflag, size = 0x4, scoped, tag = 'scoped memory for tpu_custom_call.1']
    %15 = vsyncpa [#allocation5], 0
    %16 = vsyncpa [#allocation7], 0
    %17 = vsyncpa [#allocation10], 0
    %s18 = scalar_lea.sflag [#allocation10], 1
    %19 = vsyncpa %s18, 0
    %20 = vsyncpa [#allocation13], 0
    %21 = vsyncpa [#allocation16], 0
    loop: start=0, step=1, limit=6
    $region2: #{tpu_custom_call.1} parent=1 // loop_pre_header
      _
    $region3: #{tpu_custom_call.1} parent=1 // loop_header
      %s23 = sphi 0, %s27
      %p24 = scmp.ge.s32.totalorder %s23, 6
      %s31 = sphi 0, %s31
      %s33 = sphi 0, %s31
      %s34 = sphi 0, %s33
      %s48 = sphi 0, %s34
      %s52 = sphi 0, %s52
      %s54 = sphi 0, %s52
      %s55 = sphi 0, %s54
      %s69 = sphi 0, %s55
      %s73 = sphi 0, %s73
      %s75 = sphi 0, %s73
      %s76 = sphi 0, %s75
      %s90 = sphi 0, %s76
      %s94 = sphi 0, %s94
      %s96 = sphi 0, %s94
      %s97 = sphi 0, %s96
      %s111 = sphi 0, %s97
      %s117 = sphi 0, %s119
      %s120 = sphi 0, %s117
      %s121 = sphi 0, %s120
      %s137 = sphi 0, %s121
      %s143 = sphi 0, %s145
      %s146 = sphi 0, %s143
      %s147 = sphi 0, %s146
      %s163 = sphi 0, %s147
      %s167 = sphi 0, %s167
      %s169 = sphi 0, %s167
      %s170 = sphi 0, %s169
      %s184 = sphi 0, %s170
      %s188 = sphi 0, %s188
      %s190 = sphi 0, %s188
      %s191 = sphi 0, %s190
      %s205 = sphi 0, %s191
      %s209 = sphi 0, %s209
      %s211 = sphi 0, %s209
      %s212 = sphi 0, %s211
      %s226 = sphi 0, %s212
      %s230 = sphi 0, %s230
      %s232 = sphi 0, %s230
      %s233 = sphi 0, %s232
      %s247 = sphi 0, %s233
      %s251 = sphi 0, %s251
      %s253 = sphi 0, %s251
      %s254 = sphi 0, %s253
      %s268 = sphi 0, %s254
    $region4: #{tpu_custom_call.1} parent=1 // loop_header_branch
      %26 = sbr.rel (%p24) target = $region8
    $region5: #{tpu_custom_call.1} parent=1 // loop_body
      %s28 = ssub.s32 %s23, 1
      %s29 = ssub.s32 %s23, 2
      %s30 = sadd.s32 %s23, 1
      %s32 = sadd.s32 %s31, 1
      %p35 = scmp.eq.s32.totalorder %s23, 3
      %p36 = scmp.ne.s32.totalorder %s31, %s33
      %p37 = scmp.eq.s32.totalorder %s23, 0
      %p38 = por %p36, %p37
      %p39 = scmp.ne.s32.totalorder %s31, %s33
      %p40 = scmp.eq.s32.totalorder %s28, 3
      %p41 = por %p39, %p40
      %p42 = scmp.ne.s32.totalorder %s33, %s34
      %p43 = scmp.eq.s32.totalorder %s28, 0
      %p44 = por %p42, %p43
      %p45 = scmp.ne.s32.totalorder %s33, %s34
      %p46 = scmp.eq.s32.totalorder %s29, 3
      %p47 = por %p45, %p46
      %p49 = scmp.ne.s32.totalorder %s34, %s48
      %p50 = scmp.eq.s32.totalorder %s29, 0
      %p51 = por %p49, %p50
      %s53 = sadd.s32 %s52, 1
      %p56 = scmp.eq.s32.totalorder %s23, 3
      %p57 = scmp.ne.s32.totalorder %s52, %s54
      %p58 = scmp.eq.s32.totalorder %s23, 0
      %p59 = por %p57, %p58
      %p60 = scmp.ne.s32.totalorder %s52, %s54
      %p61 = scmp.eq.s32.totalorder %s28, 3
      %p62 = por %p60, %p61
      %p63 = scmp.ne.s32.totalorder %s54, %s55
      %p64 = scmp.eq.s32.totalorder %s28, 0
      %p65 = por %p63, %p64
      %p66 = scmp.ne.s32.totalorder %s54, %s55
      %p67 = scmp.eq.s32.totalorder %s29, 3
      %p68 = por %p66, %p67
      %p70 = scmp.ne.s32.totalorder %s55, %s69
      %p71 = scmp.eq.s32.totalorder %s29, 0
      %p72 = por %p70, %p71
      %s74 = sadd.s32 %s73, 1
      %p77 = scmp.eq.s32.totalorder %s23, 3
      %p78 = scmp.ne.s32.totalorder %s73, %s75
      %p79 = scmp.eq.s32.totalorder %s23, 0
      %p80 = por %p78, %p79
      %p81 = scmp.ne.s32.totalorder %s73, %s75
      %p82 = scmp.eq.s32.totalorder %s28, 3
      %p83 = por %p81, %p82
      %p84 = scmp.ne.s32.totalorder %s75, %s76
      %p85 = scmp.eq.s32.totalorder %s28, 0
      %p86 = por %p84, %p85
      %p87 = scmp.ne.s32.totalorder %s75, %s76
      %p88 = scmp.eq.s32.totalorder %s29, 3
      %p89 = por %p87, %p88
      %p91 = scmp.ne.s32.totalorder %s76, %s90
      %p92 = scmp.eq.s32.totalorder %s29, 0
      %p93 = por %p91, %p92
      %s95 = sadd.s32 %s94, 1
      %p98 = scmp.eq.s32.totalorder %s23, 3
      %p99 = scmp.ne.s32.totalorder %s94, %s96
      %p100 = scmp.eq.s32.totalorder %s23, 0
      %p101 = por %p99, %p100
      %p102 = scmp.ne.s32.totalorder %s94, %s96
      %p103 = scmp.eq.s32.totalorder %s28, 3
      %p104 = por %p102, %p103
      %p105 = scmp.ne.s32.totalorder %s96, %s97
      %p106 = scmp.eq.s32.totalorder %s28, 0
      %p107 = por %p105, %p106
      %p108 = scmp.ne.s32.totalorder %s96, %s97
      %p109 = scmp.eq.s32.totalorder %s29, 3
      %p110 = por %p108, %p109
      %p112 = scmp.ne.s32.totalorder %s97, %s111
      %p113 = scmp.eq.s32.totalorder %s29, 0
      %p114 = por %p112, %p113
      %s115 = ssub.s32 %s23, %s30
      %p116 = scmp.eq.s32.totalorder %s115, 0
      %s118 = sadd.s32 %s117, 1
      %s119 = scalar_select %p116, %s117, %s118
      %p122 = pneg %p116
      %p123 = scmp.eq.s32.totalorder %s23, 3
      %p124 = por %p122, %p123
      %p125 = scmp.ne.s32.totalorder %s117, %s120
      %p126 = scmp.eq.s32.totalorder %s23, 0
      %p127 = por %p125, %p126
      %p128 = scmp.ne.s32.totalorder %s117, %s120
      %p129 = scmp.eq.s32.totalorder %s28, 3
      %p130 = por %p128, %p129
      %p131 = scmp.ne.s32.totalorder %s120, %s121
      %p132 = scmp.eq.s32.totalorder %s28, 0
      %p133 = por %p131, %p132
      %p134 = scmp.ne.s32.totalorder %s120, %s121
      %p135 = scmp.eq.s32.totalorder %s29, 3
      %p136 = por %p134, %p135
      %p138 = scmp.ne.s32.totalorder %s121, %s137
      %p139 = scmp.eq.s32.totalorder %s29, 0
      %p140 = por %p138, %p139
      %s141 = ssub.s32 %s23, %s30
      %p142 = scmp.eq.s32.totalorder %s141, 0
      %s144 = sadd.s32 %s143, 1
      %s145 = scalar_select %p142, %s143, %s144
      %p148 = pneg %p142
      %p149 = scmp.eq.s32.totalorder %s23, 3
      %p150 = por %p148, %p149
      %p151 = scmp.ne.s32.totalorder %s143, %s146
      %p152 = scmp.eq.s32.totalorder %s23, 0
      %p153 = por %p151, %p152
      %p154 = scmp.ne.s32.totalorder %s143, %s146
      %p155 = scmp.eq.s32.totalorder %s28, 3
      %p156 = por %p154, %p155
      %p157 = scmp.ne.s32.totalorder %s146, %s147
      %p158 = scmp.eq.s32.totalorder %s28, 0
      %p159 = por %p157, %p158
      %p160 = scmp.ne.s32.totalorder %s146, %s147
      %p161 = scmp.eq.s32.totalorder %s29, 3
      %p162 = por %p160, %p161
      %p164 = scmp.ne.s32.totalorder %s147, %s163
      %p165 = scmp.eq.s32.totalorder %s29, 0
      %p166 = por %p164, %p165
      %s168 = sadd.s32 %s167, 1
      %p171 = scmp.eq.s32.totalorder %s23, 3
      %p172 = scmp.ne.s32.totalorder %s167, %s169
      %p173 = scmp.eq.s32.totalorder %s23, 0
      %p174 = por %p172, %p173
      %p175 = scmp.ne.s32.totalorder %s167, %s169
      %p176 = scmp.eq.s32.totalorder %s28, 3
      %p177 = por %p175, %p176
      %p178 = scmp.ne.s32.totalorder %s169, %s170
      %p179 = scmp.eq.s32.totalorder %s28, 0
      %p180 = por %p178, %p179
      %p181 = scmp.ne.s32.totalorder %s169, %s170
      %p182 = scmp.eq.s32.totalorder %s29, 3
      %p183 = por %p181, %p182
      %p185 = scmp.ne.s32.totalorder %s170, %s184
      %p186 = scmp.eq.s32.totalorder %s29, 0
      %p187 = por %p185, %p186
      %s189 = sadd.s32 %s188, 1
      %p192 = scmp.eq.s32.totalorder %s23, 3
      %p193 = scmp.ne.s32.totalorder %s188, %s190
      %p194 = scmp.eq.s32.totalorder %s23, 0
      %p195 = por %p193, %p194
      %p196 = scmp.ne.s32.totalorder %s188, %s190
      %p197 = scmp.eq.s32.totalorder %s28, 3
      %p198 = por %p196, %p197
      %p199 = scmp.ne.s32.totalorder %s190, %s191
      %p200 = scmp.eq.s32.totalorder %s28, 0
      %p201 = por %p199, %p200
      %p202 = scmp.ne.s32.totalorder %s190, %s191
      %p203 = scmp.eq.s32.totalorder %s29, 3
      %p204 = por %p202, %p203
      %p206 = scmp.ne.s32.totalorder %s191, %s205
      %p207 = scmp.eq.s32.totalorder %s29, 0
      %p208 = por %p206, %p207
      %s210 = sadd.s32 %s209, 1
      %p213 = scmp.eq.s32.totalorder %s23, 3
      %p214 = scmp.ne.s32.totalorder %s209, %s211
      %p215 = scmp.eq.s32.totalorder %s23, 0
      %p216 = por %p214, %p215
      %p217 = scmp.ne.s32.totalorder %s209, %s211
      %p218 = scmp.eq.s32.totalorder %s28, 3
      %p219 = por %p217, %p218
      %p220 = scmp.ne.s32.totalorder %s211, %s212
      %p221 = scmp.eq.s32.totalorder %s28, 0
      %p222 = por %p220, %p221
      %p223 = scmp.ne.s32.totalorder %s211, %s212
      %p224 = scmp.eq.s32.totalorder %s29, 3
      %p225 = por %p223, %p224
      %p227 = scmp.ne.s32.totalorder %s212, %s226
      %p228 = scmp.eq.s32.totalorder %s29, 0
      %p229 = por %p227, %p228
      %s231 = sadd.s32 %s230, 1
      %p234 = scmp.eq.s32.totalorder %s23, 3
      %p235 = scmp.ne.s32.totalorder %s230, %s232
      %p236 = scmp.eq.s32.totalorder %s23, 0
      %p237 = por %p235, %p236
      %p238 = scmp.ne.s32.totalorder %s230, %s232
      %p239 = scmp.eq.s32.totalorder %s28, 3
      %p240 = por %p238, %p239
      %p241 = scmp.ne.s32.totalorder %s232, %s233
      %p242 = scmp.eq.s32.totalorder %s28, 0
      %p243 = por %p241, %p242
      %p244 = scmp.ne.s32.totalorder %s232, %s233
      %p245 = scmp.eq.s32.totalorder %s29, 3
      %p246 = por %p244, %p245
      %p248 = scmp.ne.s32.totalorder %s233, %s247
      %p249 = scmp.eq.s32.totalorder %s29, 0
      %p250 = por %p248, %p249
      %s252 = sadd.s32 %s251, 1
      %p255 = scmp.eq.s32.totalorder %s23, 3
      %p256 = scmp.ne.s32.totalorder %s251, %s253
      %p257 = scmp.eq.s32.totalorder %s23, 0
      %p258 = por %p256, %p257
      %p259 = scmp.ne.s32.totalorder %s251, %s253
      %p260 = scmp.eq.s32.totalorder %s28, 3
      %p261 = por %p259, %p260
      %p262 = scmp.ne.s32.totalorder %s253, %s254
      %p263 = scmp.eq.s32.totalorder %s28, 0
      %p264 = por %p262, %p263
      %p265 = scmp.ne.s32.totalorder %s253, %s254
      %p266 = scmp.eq.s32.totalorder %s29, 3
      %p267 = por %p265, %p266
      %p269 = scmp.ne.s32.totalorder %s254, %s268
      %p270 = scmp.eq.s32.totalorder %s29, 0
      %p271 = por %p269, %p270
      %p272 = scmp.le.s32.totalorder 1, %s23
      %p273 = scmp.lt.s32.totalorder %s23, 5
      %p274 = pnand %p272, %p273
      %p275 = pneg %p274
      // Predicated region
      $region9: #{tpu_custom_call.1} parent=5 // pred_check
        _
      $region10: #{tpu_custom_call.1} parent=5 // pred_check_branch
        %277 = sbr.rel (%p274) target = $region12
      $region11: #{tpu_custom_call.1} parent=5 // pred_region
        %s278 = ssub.s32 %s23, 1
        // Predicated region
        $region13: #{tpu_custom_call.1} parent=11 // pred_check
          %p279 = pneg %p44
        $region14: #{tpu_custom_call.1} parent=11 // pred_check_branch
          %281 = sbr.rel (%p279) target = $region16
        $region15: #{tpu_custom_call.1} parent=11 // pred_region
          %s283 = ssub.s32 256, 256
          %284 = vsyncadd [#allocation5], %s283
          %s285 = sshll.u32 [#allocation4], 4
          %s286 = int_to_ptr.vmem [resolvable:$true] %s285
          %291 = dma.hbm_to_vmem [thread:$0]  %s0, 256, %s286, [#allocation5], 128, 128, 8
        $region16: #{tpu_custom_call.1} parent=11 // pred_fallthru
          _
        // Predicated region
        $region17: #{tpu_custom_call.1} parent=11 // pred_check
          %p292 = pneg %p65
        $region18: #{tpu_custom_call.1} parent=11 // pred_check_branch
          %294 = sbr.rel (%p292) target = $region20
        $region19: #{tpu_custom_call.1} parent=11 // pred_region
          %s296 = ssub.s32 256, 256
          %297 = vsyncadd [#allocation7], %s296
          %s298 = sshll.u32 [#allocation6], 4
          %s299 = int_to_ptr.vmem [resolvable:$true] %s298
          %304 = dma.hbm_to_vmem [thread:$0]  %s1, 256, %s299, [#allocation7], 128, 128, 8
        $region20: #{tpu_custom_call.1} parent=11 // pred_fallthru
          _
        // Predicated region
        $region21: #{tpu_custom_call.1} parent=11 // pred_check
          %p305 = pneg %p86
        $region22: #{tpu_custom_call.1} parent=11 // pred_check_branch
          %307 = sbr.rel (%p305) target = $region24
        $region23: #{tpu_custom_call.1} parent=11 // pred_region
          _
        $region24: #{tpu_custom_call.1} parent=11 // pred_fallthru
          _
        // Predicated region
        $region25: #{tpu_custom_call.1} parent=11 // pred_check
          %p308 = pneg %p107
        $region26: #{tpu_custom_call.1} parent=11 // pred_check_branch
          %310 = sbr.rel (%p308) target = $region28
        $region27: #{tpu_custom_call.1} parent=11 // pred_region
          %s312 = ssub.s32 2304, 2304
          %313 = vsyncadd [#allocation7], %s312
          %s314 = sshll.u32 [#allocation8], 4
          %s315 = int_to_ptr.vmem [resolvable:$true] %s314
          %320 = dma.hbm_to_vmem [thread:$0]  %s3, 2304, %s315, [#allocation7], 1152, 1152, 72
        $region28: #{tpu_custom_call.1} parent=11 // pred_fallthru
          _
        // Predicated region
        $region29: #{tpu_custom_call.1} parent=11 // pred_check
          %p321 = pneg %p180
        $region30: #{tpu_custom_call.1} parent=11 // pred_check_branch
          %323 = sbr.rel (%p321) target = $region32
        $region31: #{tpu_custom_call.1} parent=11 // pred_region
          %s325 = ssub.s32 9216, 9216
          %326 = vsyncadd [#allocation13], %s325
          %s327 = sshll.u32 [#allocation12], 4
          %s328 = int_to_ptr.vmem [resolvable:$true] %s327
          %333 = dma.hbm_to_vmem [thread:$0]  %s6, 9216, %s328, [#allocation13], 64, 64, 4
        $region32: #{tpu_custom_call.1} parent=11 // pred_fallthru
          _
        // Predicated region
        $region33: #{tpu_custom_call.1} parent=11 // pred_check
          %p334 = pneg %p201
        $region34: #{tpu_custom_call.1} parent=11 // pred_check_branch
          %336 = sbr.rel (%p334) target = $region36
        $region35: #{tpu_custom_call.1} parent=11 // pred_region
          %s338 = ssub.s32 16, 16
          %339 = vsyncadd [#allocation13], %s338
          %s341 = sshll.u32 [#allocation14], 4
          %s342 = int_to_ptr.vmem [resolvable:$true] %s341
          %344 = dma.hbm_to_vmem [thread:$0]  %s7, 16, %s342, [#allocation13]
        $region36: #{tpu_custom_call.1} parent=11 // pred_fallthru
          _
        // Predicated region
        $region37: #{tpu_custom_call.1} parent=11 // pred_check
          %p345 = pneg %p222
        $region38: #{tpu_custom_call.1} parent=11 // pred_check_branch
          %347 = sbr.rel (%p345) target = $region40
        $region39: #{tpu_custom_call.1} parent=11 // pred_region
          _
        $region40: #{tpu_custom_call.1} parent=11 // pred_fallthru
          _
        // Predicated region
        $region41: #{tpu_custom_call.1} parent=11 // pred_check
          %p348 = pneg %p243
        $region42: #{tpu_custom_call.1} parent=11 // pred_check_branch
          %350 = sbr.rel (%p348) target = $region44
        $region43: #{tpu_custom_call.1} parent=11 // pred_region
          %s352 = ssub.s32 16, 16
          %353 = vsyncadd [#allocation16], %s352
          %s355 = sshll.u32 [#allocation15], 4
          %s356 = int_to_ptr.vmem [resolvable:$true] %s355
          %358 = dma.hbm_to_vmem [thread:$0]  %s9, 16, %s356, [#allocation16]
        $region44: #{tpu_custom_call.1} parent=11 // pred_fallthru
          _
      $region12: #{tpu_custom_call.1} parent=5 // pred_fallthru
        _
      %p359 = scmp.lt.s32.totalorder %s23, 4
      // Predicated region
      $region45: #{tpu_custom_call.1} parent=5 // pred_check
        %p360 = pneg %p359
      $region46: #{tpu_custom_call.1} parent=5 // pred_check_branch
        %362 = sbr.rel (%p360) target = $region48
      $region47: #{tpu_custom_call.1} parent=5 // pred_region
        // Predicated region
        $region49: #{tpu_custom_call.1} parent=47 // pred_check
          %p363 = pneg %p127
        $region50: #{tpu_custom_call.1} parent=47 // pred_check_branch
          %365 = sbr.rel (%p363) target = $region52
        $region51: #{tpu_custom_call.1} parent=47 // pred_region
          %s366 = sand.u32 %s23, 1
          %s367 = scalar_lea.sflag [#allocation10], %s366
          %s368 = sand.u32 %s117, 1
          %s369 = smul.addr %s368, 576
          %s370 = scalar_lea.vmem [#allocation9], %s369
          %s372 = ssub.s32 9216, 9216
          %373 = vsyncadd %s367, %s372
          %s374 = smul.addr %s23, 64
          %s375 = scalar_lea.hbm %s4, %s374
          %s376 = sshll.u32 %s370, 4
          %s377 = int_to_ptr.vmem [resolvable:$true] %s376
          %382 = dma.hbm_to_vmem [thread:$0]  %s375, 9216, %s377, %s367, 256, 64, 4
        $region52: #{tpu_custom_call.1} parent=47 // pred_fallthru
          _
        // Predicated region
        $region53: #{tpu_custom_call.1} parent=47 // pred_check
          %p383 = pneg %p153
        $region54: #{tpu_custom_call.1} parent=47 // pred_check_branch
          %385 = sbr.rel (%p383) target = $region56
        $region55: #{tpu_custom_call.1} parent=47 // pred_region
          %s386 = sand.u32 %s23, 1
          %s387 = scalar_lea.sflag [#allocation10], %s386
          %s388 = sand.u32 %s143, 1
          %s389 = scalar_lea.vmem [#allocation11], %s388
          %s391 = ssub.s32 16, 16
          %392 = vsyncadd %s387, %s391
          %s393 = smul.addr %s23, 16
          %s394 = scalar_lea.hbm %s5, %s393
          %s396 = sshll.u32 %s389, 4
          %s397 = int_to_ptr.vmem [resolvable:$true] %s396
          %399 = dma.hbm_to_vmem [thread:$0]  %s394, 16, %s397, %s387
        $region56: #{tpu_custom_call.1} parent=47 // pred_fallthru
          _
      $region48: #{tpu_custom_call.1} parent=5 // pred_fallthru
        _
      %p400 = scmp.le.s32.totalorder 1, %s23
      %p401 = scmp.lt.s32.totalorder %s23, 5
      %p402 = pnand %p400, %p401
      %p403 = pneg %p402
      // Predicated region
      $region57: #{tpu_custom_call.1} parent=5 // pred_check
        _
      $region58: #{tpu_custom_call.1} parent=5 // pred_check_branch
        %405 = sbr.rel (%p402) target = $region60
      $region59: #{tpu_custom_call.1} parent=5 // pred_region
        %s406 = ssub.s32 %s23, 1
        // Predicated region
        $region61: #{tpu_custom_call.1} parent=59 // pred_check
          %p407 = pneg %p44
        $region62: #{tpu_custom_call.1} parent=59 // pred_check_branch
          %409 = sbr.rel (%p407) target = $region64
        $region63: #{tpu_custom_call.1} parent=59 // pred_region
          %410 = dma.done [#allocation5], 256
        $region64: #{tpu_custom_call.1} parent=59 // pred_fallthru
          _
        // Predicated region
        $region65: #{tpu_custom_call.1} parent=59 // pred_check
          %p411 = pneg %p65
        $region66: #{tpu_custom_call.1} parent=59 // pred_check_branch
          %413 = sbr.rel (%p411) target = $region68
        $region67: #{tpu_custom_call.1} parent=59 // pred_region
          %414 = dma.done [#allocation7], 256
        $region68: #{tpu_custom_call.1} parent=59 // pred_fallthru
          _
        // Predicated region
        $region69: #{tpu_custom_call.1} parent=59 // pred_check
          %p415 = pneg %p107
        $region70: #{tpu_custom_call.1} parent=59 // pred_check_branch
          %417 = sbr.rel (%p415) target = $region72
        $region71: #{tpu_custom_call.1} parent=59 // pred_region
          %418 = dma.done [#allocation7], 2304
        $region72: #{tpu_custom_call.1} parent=59 // pred_fallthru
          _
        %s419 = sand.u32 %s28, 1
        %s420 = scalar_lea.sflag [#allocation10], %s419
        %s421 = sand.u32 %s120, 1
        %s422 = smul.addr %s421, 576
        %s423 = scalar_lea.vmem [#allocation9], %s422
        // Predicated region
        $region73: #{tpu_custom_call.1} parent=59 // pred_check
          %p424 = pneg %p133
        $region74: #{tpu_custom_call.1} parent=59 // pred_check_branch
          %426 = sbr.rel (%p424) target = $region76
        $region75: #{tpu_custom_call.1} parent=59 // pred_region
          %427 = dma.done %s420, 9216
        $region76: #{tpu_custom_call.1} parent=59 // pred_fallthru
          _
        %s428 = sand.u32 %s28, 1
        %s429 = scalar_lea.sflag [#allocation10], %s428
        %s430 = sand.u32 %s146, 1
        %s431 = scalar_lea.vmem [#allocation11], %s430
        // Predicated region
        $region77: #{tpu_custom_call.1} parent=59 // pred_check
          %p432 = pneg %p159
        $region78: #{tpu_custom_call.1} parent=59 // pred_check_branch
          %434 = sbr.rel (%p432) target = $region80
        $region79: #{tpu_custom_call.1} parent=59 // pred_region
          %435 = dma.done %s429, 16
        $region80: #{tpu_custom_call.1} parent=59 // pred_fallthru
          _
        // Predicated region
        $region81: #{tpu_custom_call.1} parent=59 // pred_check
          %p436 = pneg %p180
        $region82: #{tpu_custom_call.1} parent=59 // pred_check_branch
          %438 = sbr.rel (%p436) target = $region84
        $region83: #{tpu_custom_call.1} parent=59 // pred_region
          %439 = dma.done [#allocation13], 9216
        $region84: #{tpu_custom_call.1} parent=59 // pred_fallthru
          _
        // Predicated region
        $region85: #{tpu_custom_call.1} parent=59 // pred_check
          %p440 = pneg %p201
        $region86: #{tpu_custom_call.1} parent=59 // pred_check_branch
          %442 = sbr.rel (%p440) target = $region88
        $region87: #{tpu_custom_call.1} parent=59 // pred_region
          %443 = dma.done [#allocation13], 16
        $region88: #{tpu_custom_call.1} parent=59 // pred_fallthru
          _
        // Predicated region
        $region89: #{tpu_custom_call.1} parent=59 // pred_check
          %p444 = pneg %p243
        $region90: #{tpu_custom_call.1} parent=59 // pred_check_branch
          %446 = sbr.rel (%p444) target = $region92
        $region91: #{tpu_custom_call.1} parent=59 // pred_region
          %447 = dma.done [#allocation16], 16
        $region92: #{tpu_custom_call.1} parent=59 // pred_fallthru
          _
        %p448 = pneg %p44
        %p449 = pneg %p41
        %p450 = pneg %p65
        %p451 = pneg %p62
        %p452 = pneg %p86
        %p453 = pneg %p83
        %p454 = pneg %p107
        %p455 = pneg %p104
        %s456 = sand.u32 %s28, 1
        %s457 = scalar_lea.sflag [#allocation10], %s456
        %s458 = sand.u32 %s120, 1
        %s459 = smul.addr %s458, 576
        %s460 = scalar_lea.vmem [#allocation9], %s459
        %p461 = pneg %p133
        %p462 = pneg %p130
        %s463 = sand.u32 %s28, 1
        %s464 = scalar_lea.sflag [#allocation10], %s463
        %s465 = sand.u32 %s146, 1
        %s466 = scalar_lea.vmem [#allocation11], %s465
        %p467 = pneg %p159
        %p468 = pneg %p156
        %p469 = pneg %p180
        %p470 = pneg %p177
        %p471 = pneg %p201
        %p472 = pneg %p198
        %p473 = pneg %p222
        %p474 = pneg %p219
        %p475 = pneg %p243
        %p476 = pneg %p240
        %p477 = pneg %p264
        %p478 = pneg %p261
        %p480 = scmp.eq.s32.totalorder %s28, 0
        // Predicated region
        $region93: #{tpu_custom_call.1} parent=59 // pred_check
          %p481 = pneg %p480
        $region94: #{tpu_custom_call.1} parent=59 // pred_check_branch
          %483 = sbr.rel (%p481) target = $region96
        $region95: #{tpu_custom_call.1} parent=59 // pred_region
          %v484 = vld [vmem:[#allocation6] sm:$0xff]
          %v485 = vld [vmem:[#allocation6 + $0x8] sm:$0xff]
          %v486 = vld [vmem:[#allocation8] sm:$0xff]
          %v487 = vld [vmem:[#allocation8 + $0x8] sm:$0xff]
          %v488 = vld [vmem:[#allocation8 + $0x10] sm:$0xff]
          %v489 = vld [vmem:[#allocation8 + $0x18] sm:$0xff]
          %v490 = vld [vmem:[#allocation8 + $0x20] sm:$0xff]
          %v491 = vld [vmem:[#allocation8 + $0x28] sm:$0xff]
          %v492 = vld [vmem:[#allocation8 + $0x30] sm:$0xff]
          %v493 = vld [vmem:[#allocation8 + $0x38] sm:$0xff]
          %v494 = vld [vmem:[#allocation8 + $0x40] sm:$0xff]
          %v495 = vld [vmem:[#allocation8 + $0x48] sm:$0xff]
          %v496 = vld [vmem:[#allocation8 + $0x50] sm:$0xff]
          %v497 = vld [vmem:[#allocation8 + $0x58] sm:$0xff]
          %v498 = vld [vmem:[#allocation8 + $0x60] sm:$0xff]
          %v499 = vld [vmem:[#allocation8 + $0x68] sm:$0xff]
          %v500 = vld [vmem:[#allocation8 + $0x70] sm:$0xff]
          %v501 = vld [vmem:[#allocation8 + $0x78] sm:$0xff]
          %v502 = vld [vmem:[#allocation8 + $0x80] sm:$0xff]
          %v503 = vld [vmem:[#allocation8 + $0x88] sm:$0xff]
          %v505 = vrot.slane %v485, 3
          %vm508 = vcmask 1044480
          %v509 = vrot.slane %v484, 3
          %v510 = vsel %vm508, %v509, %v505
          %v513 = vsel %vm508, %v505, %v509
          %v514 = vrot.slane %v485, 4
          %vm516 = vcmask 1043456
          %v517 = vrot.slane %v484, 4
          %v518 = vsel %vm516, %v517, %v514
          %v521 = vsel %vm516, %v514, %v517
          %v522 = vrot.slane %v485, 5
          %vm524 = vcmask 1042432
          %v525 = vrot.slane %v484, 5
          %v526 = vsel %vm524, %v525, %v522
          %v529 = vsel %vm524, %v522, %v525
          %v530 = vrot.slane %v485, 7
          %vm532 = vcmask 1040384
          %v533 = vrot.slane %v484, 7
          %v534 = vsel %vm532, %v533, %v530
          %v537 = vsel %vm532, %v530, %v533
          %vm538 = vcmask 1046528
          %v539 = vrot.slane %v484, 1
          %v540 = vrot.slane %v485, 1
          %v541 = vsel %vm538, %v539, %v540
          %v545 = vsel %vm538, %v540, %v539
          %v546 = vmul.f32 %v513, %v486
          %v547 = vmul.f32 %v521, %v487
          %v548 = vmul.f32 %v529, %v488
          %v549 = vmul.f32 %v537, %v489
          %v550 = vmul.f32 %v484, %v490
          %v551 = vmul.f32 %v541, %v491
          %v552 = vmul.f32 %v510, %v492
          %v553 = vmul.f32 %v518, %v493
          %v554 = vmul.f32 %v526, %v494
          %v555 = vmul.f32 %v510, %v495
          %v556 = vmul.f32 %v518, %v496
          %v557 = vmul.f32 %v526, %v497
          %v558 = vmul.f32 %v534, %v498
          %v559 = vmul.f32 %v485, %v499
          %v560 = vmul.f32 %v545, %v500
          %v561 = vmul.f32 %v513, %v501
          %v562 = vmul.f32 %v521, %v502
          %v563 = vmul.f32 %v529, %v503
          %v564 = vpack.c.bf16 %v555, %v546
          %v565 = vpack.c.bf16 %v556, %v547
          %v566 = vpack.c.bf16 %v557, %v548
          %v567 = vpack.c.bf16 %v558, %v549
          %v568 = vpack.c.bf16 %v559, %v550
          %v569 = vpack.c.bf16 %v560, %v551
          %v570 = vpack.c.bf16 %v561, %v552
          %v571 = vpack.c.bf16 %v562, %v553
          %v572 = vpack.c.bf16 %v563, %v554
          %573 = vst [vmem:[#allocation2] sm:$0xff] %v564
          %574 = vst [vmem:[#allocation2 + $0x8] sm:$0xff] %v565
          %575 = vst [vmem:[#allocation2 + $0x10] sm:$0xff] %v566
          %576 = vst [vmem:[#allocation2 + $0x18] sm:$0xff] %v567
          %577 = vst [vmem:[#allocation2 + $0x20] sm:$0xff] %v568
          %578 = vst [vmem:[#allocation2 + $0x28] sm:$0xff] %v569
          %579 = vst [vmem:[#allocation2 + $0x30] sm:$0xff] %v570
          %580 = vst [vmem:[#allocation2 + $0x38] sm:$0xff] %v571
          %581 = vst [vmem:[#allocation2 + $0x40] sm:$0xff] %v572
        $region96: #{tpu_custom_call.1} parent=59 // pred_fallthru
          _
        %v582 = vld [vmem:[#allocation2] sm:$0xff]
        %v583 = vld [vmem:[#allocation2 + $0x8] sm:$0xff]
        %v584 = vld [vmem:[#allocation2 + $0x10] sm:$0xff]
        %v585 = vld [vmem:[#allocation2 + $0x18] sm:$0xff]
        %v586 = vld [vmem:[#allocation2 + $0x20] sm:$0xff]
        %v587 = vld [vmem:[#allocation2 + $0x28] sm:$0xff]
        %v588 = vld [vmem:[#allocation2 + $0x30] sm:$0xff]
        %v589 = vld [vmem:[#allocation2 + $0x38] sm:$0xff]
        %v590 = vld [vmem:[#allocation2 + $0x40] sm:$0xff]
        %v591 = vld [vmem:[%s423] sm:$0xf]
        %v592 = vld [vmem:[%s423 + $0x4] sm:$0xf]
        %v593 = vld [vmem:[%s423 + $0x8] sm:$0xf]
        %v594 = vld [vmem:[%s423 + $0xc] sm:$0xf]
        %v595 = vld [vmem:[%s423 + $0x10] sm:$0xf]
        %v596 = vld [vmem:[%s423 + $0x14] sm:$0xf]
        %v597 = vld [vmem:[%s423 + $0x18] sm:$0xf]
        %v598 = vld [vmem:[%s423 + $0x1c] sm:$0xf]
        %v599 = vld [vmem:[%s423 + $0x20] sm:$0xf]
        %v600 = vld [vmem:[%s423 + $0x24] sm:$0xf]
        %v601 = vld [vmem:[%s423 + $0x28] sm:$0xf]
        %v602 = vld [vmem:[%s423 + $0x2c] sm:$0xf]
        %v603 = vld [vmem:[%s423 + $0x30] sm:$0xf]
        %v604 = vld [vmem:[%s423 + $0x34] sm:$0xf]
        %v605 = vld [vmem:[%s423 + $0x38] sm:$0xf]
        %v606 = vld [vmem:[%s423 + $0x3c] sm:$0xf]
        %v607 = vld [vmem:[%s423 + $0x40] sm:$0xf]
        %v608 = vld [vmem:[%s423 + $0x44] sm:$0xf]
        %v609 = vld [vmem:[%s423 + $0x48] sm:$0xf]
        %v610 = vld [vmem:[%s423 + $0x4c] sm:$0xf]
        %v611 = vld [vmem:[%s423 + $0x50] sm:$0xf]
        %v612 = vld [vmem:[%s423 + $0x54] sm:$0xf]
        %v613 = vld [vmem:[%s423 + $0x58] sm:$0xf]
        %v614 = vld [vmem:[%s423 + $0x5c] sm:$0xf]
        %v615 = vld [vmem:[%s423 + $0x60] sm:$0xf]
        %v616 = vld [vmem:[%s423 + $0x64] sm:$0xf]
        %v617 = vld [vmem:[%s423 + $0x68] sm:$0xf]
        %v618 = vld [vmem:[%s423 + $0x6c] sm:$0xf]
        %v619 = vld [vmem:[%s423 + $0x70] sm:$0xf]
        %v620 = vld [vmem:[%s423 + $0x74] sm:$0xf]
        %v621 = vld [vmem:[%s423 + $0x78] sm:$0xf]
        %v622 = vld [vmem:[%s423 + $0x7c] sm:$0xf]
        %v623 = vld [vmem:[%s423 + $0x80] sm:$0xf]
        %v624 = vld [vmem:[%s423 + $0x84] sm:$0xf]
        %v625 = vld [vmem:[%s423 + $0x88] sm:$0xf]
        %v626 = vld [vmem:[%s423 + $0x8c] sm:$0xf]
        %v627 = vld [vmem:[%s423 + $0x90] sm:$0xf]
        %v628 = vld [vmem:[%s423 + $0x94] sm:$0xf]
        %v629 = vld [vmem:[%s423 + $0x98] sm:$0xf]
        %v630 = vld [vmem:[%s423 + $0x9c] sm:$0xf]
        %v631 = vld [vmem:[%s423 + $0xa0] sm:$0xf]
        %v632 = vld [vmem:[%s423 + $0xa4] sm:$0xf]
        %v633 = vld [vmem:[%s423 + $0xa8] sm:$0xf]
        %v634 = vld [vmem:[%s423 + $0xac] sm:$0xf]
        %v635 = vld [vmem:[%s423 + $0xb0] sm:$0xf]
        %v636 = vld [vmem:[%s423 + $0xb4] sm:$0xf]
        %v637 = vld [vmem:[%s423 + $0xb8] sm:$0xf]
        %v638 = vld [vmem:[%s423 + $0xbc] sm:$0xf]
        %v639 = vld [vmem:[%s423 + $0xc0] sm:$0xf]
        %v640 = vld [vmem:[%s423 + $0xc4] sm:$0xf]
        %v641 = vld [vmem:[%s423 + $0xc8] sm:$0xf]
        %v642 = vld [vmem:[%s423 + $0xcc] sm:$0xf]
        %v643 = vld [vmem:[%s423 + $0xd0] sm:$0xf]
        %v644 = vld [vmem:[%s423 + $0xd4] sm:$0xf]
        %v645 = vld [vmem:[%s423 + $0xd8] sm:$0xf]
        %v646 = vld [vmem:[%s423 + $0xdc] sm:$0xf]
        %v647 = vld [vmem:[%s423 + $0xe0] sm:$0xf]
        %v648 = vld [vmem:[%s423 + $0xe4] sm:$0xf]
        %v649 = vld [vmem:[%s423 + $0xe8] sm:$0xf]
        %v650 = vld [vmem:[%s423 + $0xec] sm:$0xf]
        %v651 = vld [vmem:[%s423 + $0xf0] sm:$0xf]
        %v652 = vld [vmem:[%s423 + $0xf4] sm:$0xf]
        %v653 = vld [vmem:[%s423 + $0xf8] sm:$0xf]
        %v654 = vld [vmem:[%s423 + $0xfc] sm:$0xf]
        %v655 = vld [vmem:[%s423 + $0x100] sm:$0xf]
        %v656 = vld [vmem:[%s423 + $0x104] sm:$0xf]
        %v657 = vld [vmem:[%s423 + $0x108] sm:$0xf]
        %v658 = vld [vmem:[%s423 + $0x10c] sm:$0xf]
        %v659 = vld [vmem:[%s423 + $0x110] sm:$0xf]
        %v660 = vld [vmem:[%s423 + $0x114] sm:$0xf]
        %v661 = vld [vmem:[%s423 + $0x118] sm:$0xf]
        %v662 = vld [vmem:[%s423 + $0x11c] sm:$0xf]
        %v663 = vld [vmem:[%s423 + $0x120] sm:$0xf]
        %v664 = vld [vmem:[%s423 + $0x124] sm:$0xf]
        %v665 = vld [vmem:[%s423 + $0x128] sm:$0xf]
        %v666 = vld [vmem:[%s423 + $0x12c] sm:$0xf]
        %v667 = vld [vmem:[%s423 + $0x130] sm:$0xf]
        %v668 = vld [vmem:[%s423 + $0x134] sm:$0xf]
        %v669 = vld [vmem:[%s423 + $0x138] sm:$0xf]
        %v670 = vld [vmem:[%s423 + $0x13c] sm:$0xf]
        %v671 = vld [vmem:[%s423 + $0x140] sm:$0xf]
        %v672 = vld [vmem:[%s423 + $0x144] sm:$0xf]
        %v673 = vld [vmem:[%s423 + $0x148] sm:$0xf]
        %v674 = vld [vmem:[%s423 + $0x14c] sm:$0xf]
        %v675 = vld [vmem:[%s423 + $0x150] sm:$0xf]
        %v676 = vld [vmem:[%s423 + $0x154] sm:$0xf]
        %v677 = vld [vmem:[%s423 + $0x158] sm:$0xf]
        %v678 = vld [vmem:[%s423 + $0x15c] sm:$0xf]
        %v679 = vld [vmem:[%s423 + $0x160] sm:$0xf]
        %v680 = vld [vmem:[%s423 + $0x164] sm:$0xf]
        %v681 = vld [vmem:[%s423 + $0x168] sm:$0xf]
        %v682 = vld [vmem:[%s423 + $0x16c] sm:$0xf]
        %v683 = vld [vmem:[%s423 + $0x170] sm:$0xf]
        %v684 = vld [vmem:[%s423 + $0x174] sm:$0xf]
        %v685 = vld [vmem:[%s423 + $0x178] sm:$0xf]
        %v686 = vld [vmem:[%s423 + $0x17c] sm:$0xf]
        %v687 = vld [vmem:[%s423 + $0x180] sm:$0xf]
        %v688 = vld [vmem:[%s423 + $0x184] sm:$0xf]
        %v689 = vld [vmem:[%s423 + $0x188] sm:$0xf]
        %v690 = vld [vmem:[%s423 + $0x18c] sm:$0xf]
        %v691 = vld [vmem:[%s423 + $0x190] sm:$0xf]
        %v692 = vld [vmem:[%s423 + $0x194] sm:$0xf]
        %v693 = vld [vmem:[%s423 + $0x198] sm:$0xf]
        %v694 = vld [vmem:[%s423 + $0x19c] sm:$0xf]
        %v695 = vld [vmem:[%s423 + $0x1a0] sm:$0xf]
        %v696 = vld [vmem:[%s423 + $0x1a4] sm:$0xf]
        %v697 = vld [vmem:[%s423 + $0x1a8] sm:$0xf]
        %v698 = vld [vmem:[%s423 + $0x1ac] sm:$0xf]
        %v699 = vld [vmem:[%s423 + $0x1b0] sm:$0xf]
        %v700 = vld [vmem:[%s423 + $0x1b4] sm:$0xf]
        %v701 = vld [vmem:[%s423 + $0x1b8] sm:$0xf]
        %v702 = vld [vmem:[%s423 + $0x1bc] sm:$0xf]
        %v703 = vld [vmem:[%s423 + $0x1c0] sm:$0xf]
        %v704 = vld [vmem:[%s423 + $0x1c4] sm:$0xf]
        %v705 = vld [vmem:[%s423 + $0x1c8] sm:$0xf]
        %v706 = vld [vmem:[%s423 + $0x1cc] sm:$0xf]
        %v707 = vld [vmem:[%s423 + $0x1d0] sm:$0xf]
        %v708 = vld [vmem:[%s423 + $0x1d4] sm:$0xf]
        %v709 = vld [vmem:[%s423 + $0x1d8] sm:$0xf]
        %v710 = vld [vmem:[%s423 + $0x1dc] sm:$0xf]
        %v711 = vld [vmem:[%s423 + $0x1e0] sm:$0xf]
        %v712 = vld [vmem:[%s423 + $0x1e4] sm:$0xf]
        %v713 = vld [vmem:[%s423 + $0x1e8] sm:$0xf]
        %v714 = vld [vmem:[%s423 + $0x1ec] sm:$0xf]
        %v715 = vld [vmem:[%s423 + $0x1f0] sm:$0xf]
        %v716 = vld [vmem:[%s423 + $0x1f4] sm:$0xf]
        %v717 = vld [vmem:[%s423 + $0x1f8] sm:$0xf]
        %v718 = vld [vmem:[%s423 + $0x1fc] sm:$0xf]
        %v719 = vld [vmem:[%s423 + $0x200] sm:$0xf]
        %v720 = vld [vmem:[%s423 + $0x204] sm:$0xf]
        %v721 = vld [vmem:[%s423 + $0x208] sm:$0xf]
        %v722 = vld [vmem:[%s423 + $0x20c] sm:$0xf]
        %v723 = vld [vmem:[%s423 + $0x210] sm:$0xf]
        %v724 = vld [vmem:[%s423 + $0x214] sm:$0xf]
        %v725 = vld [vmem:[%s423 + $0x218] sm:$0xf]
        %v726 = vld [vmem:[%s423 + $0x21c] sm:$0xf]
        %v727 = vld [vmem:[%s423 + $0x220] sm:$0xf]
        %v728 = vld [vmem:[%s423 + $0x224] sm:$0xf]
        %v729 = vld [vmem:[%s423 + $0x228] sm:$0xf]
        %v730 = vld [vmem:[%s423 + $0x22c] sm:$0xf]
        %v731 = vld [vmem:[%s423 + $0x230] sm:$0xf]
        %v732 = vld [vmem:[%s423 + $0x234] sm:$0xf]
        %v733 = vld [vmem:[%s423 + $0x238] sm:$0xf]
        %v734 = vld [vmem:[%s423 + $0x23c] sm:$0xf]
        %v735 = vld [vmem:[%s431] sm:$0x1]
        %v737 = vlaneseq
        %v738 = vshrl.u32 %v737, 7
        %v739 = vsub.s32 0, %v738
        %v740 = vrot.slane %v735, %v739
        %v886 = vunpack.c.l.b16 %v591
        %v887 = vunpack.c.l.b16 %v592
        %v888 = vunpack.c.l.b16 %v593
        %v889 = vunpack.c.l.b16 %v594
        %v890 = vunpack.c.l.b16 %v595
        %v891 = vunpack.c.l.b16 %v596
        %v892 = vunpack.c.l.b16 %v597
        %v893 = vunpack.c.l.b16 %v598
        %v894 = vunpack.c.l.b16 %v599
        %v895 = vunpack.c.l.b16 %v600
        %v896 = vunpack.c.l.b16 %v601
        %v897 = vunpack.c.l.b16 %v602
        %v898 = vunpack.c.l.b16 %v603
        %v899 = vunpack.c.l.b16 %v604
        %v900 = vunpack.c.l.b16 %v605
        %v901 = vunpack.c.l.b16 %v606
        %v902 = vunpack.c.l.b16 %v607
        %v903 = vunpack.c.l.b16 %v608
        %v904 = vunpack.c.l.b16 %v609
        %v905 = vunpack.c.l.b16 %v610
        %v906 = vunpack.c.l.b16 %v611
        %v907 = vunpack.c.l.b16 %v612
        %v908 = vunpack.c.l.b16 %v613
        %v909 = vunpack.c.l.b16 %v614
        %v910 = vunpack.c.l.b16 %v615
        %v911 = vunpack.c.l.b16 %v616
        %v912 = vunpack.c.l.b16 %v617
        %v913 = vunpack.c.l.b16 %v618
        %v914 = vunpack.c.l.b16 %v619
        %v915 = vunpack.c.l.b16 %v620
        %v916 = vunpack.c.l.b16 %v621
        %v917 = vunpack.c.l.b16 %v622
        %v918 = vunpack.c.l.b16 %v623
        %v919 = vunpack.c.l.b16 %v624
        %v920 = vunpack.c.l.b16 %v625
        %v921 = vunpack.c.l.b16 %v626
        %v922 = vunpack.c.l.b16 %v627
        %v923 = vunpack.c.l.b16 %v628
        %v924 = vunpack.c.l.b16 %v629
        %v925 = vunpack.c.l.b16 %v630
        %v926 = vunpack.c.l.b16 %v631
        %v927 = vunpack.c.l.b16 %v632
        %v928 = vunpack.c.l.b16 %v633
        %v929 = vunpack.c.l.b16 %v634
        %v930 = vunpack.c.l.b16 %v635
        %v931 = vunpack.c.l.b16 %v636
        %v932 = vunpack.c.l.b16 %v637
        %v933 = vunpack.c.l.b16 %v638
        %v934 = vunpack.c.l.b16 %v639
        %v935 = vunpack.c.l.b16 %v640
        %v936 = vunpack.c.l.b16 %v641
        %v937 = vunpack.c.l.b16 %v642
        %v938 = vunpack.c.l.b16 %v643
        %v939 = vunpack.c.l.b16 %v644
        %v940 = vunpack.c.l.b16 %v645
        %v941 = vunpack.c.l.b16 %v646
        %v942 = vunpack.c.l.b16 %v647
        %v943 = vunpack.c.l.b16 %v648
        %v944 = vunpack.c.l.b16 %v649
        %v945 = vunpack.c.l.b16 %v650
        %v946 = vunpack.c.l.b16 %v651
        %v947 = vunpack.c.l.b16 %v652
        %v948 = vunpack.c.l.b16 %v653
        %v949 = vunpack.c.l.b16 %v654
        %v950 = vunpack.c.l.b16 %v655
        %v951 = vunpack.c.l.b16 %v656
        %v952 = vunpack.c.l.b16 %v657
        %v953 = vunpack.c.l.b16 %v658
        %v954 = vunpack.c.l.b16 %v659
        %v955 = vunpack.c.l.b16 %v660
        %v956 = vunpack.c.l.b16 %v661
        %v957 = vunpack.c.l.b16 %v662
        %v958 = vunpack.c.l.b16 %v663
        %v959 = vunpack.c.l.b16 %v664
        %v960 = vunpack.c.l.b16 %v665
        %v961 = vunpack.c.l.b16 %v666
        %v962 = vunpack.c.l.b16 %v667
        %v963 = vunpack.c.l.b16 %v668
        %v964 = vunpack.c.l.b16 %v669
        %v965 = vunpack.c.l.b16 %v670
        %v966 = vunpack.c.l.b16 %v671
        %v967 = vunpack.c.l.b16 %v672
        %v968 = vunpack.c.l.b16 %v673
        %v969 = vunpack.c.l.b16 %v674
        %v970 = vunpack.c.l.b16 %v675
        %v971 = vunpack.c.l.b16 %v676
        %v972 = vunpack.c.l.b16 %v677
        %v973 = vunpack.c.l.b16 %v678
        %v974 = vunpack.c.l.b16 %v679
        %v975 = vunpack.c.l.b16 %v680
        %v976 = vunpack.c.l.b16 %v681
        %v977 = vunpack.c.l.b16 %v682
        %v978 = vunpack.c.l.b16 %v683
        %v979 = vunpack.c.l.b16 %v684
        %v980 = vunpack.c.l.b16 %v685
        %v981 = vunpack.c.l.b16 %v686
        %v982 = vunpack.c.l.b16 %v687
        %v983 = vunpack.c.l.b16 %v688
        %v984 = vunpack.c.l.b16 %v689
        %v985 = vunpack.c.l.b16 %v690
        %v986 = vunpack.c.l.b16 %v691
        %v987 = vunpack.c.l.b16 %v692
        %v988 = vunpack.c.l.b16 %v693
        %v989 = vunpack.c.l.b16 %v694
        %v990 = vunpack.c.l.b16 %v695
        %v991 = vunpack.c.l.b16 %v696
        %v992 = vunpack.c.l.b16 %v697
        %v993 = vunpack.c.l.b16 %v698
        %v994 = vunpack.c.l.b16 %v699
        %v995 = vunpack.c.l.b16 %v700
        %v996 = vunpack.c.l.b16 %v701
        %v997 = vunpack.c.l.b16 %v702
        %v998 = vunpack.c.l.b16 %v703
        %v999 = vunpack.c.l.b16 %v704
        %v1000 = vunpack.c.l.b16 %v705
        %v1001 = vunpack.c.l.b16 %v706
        %v1002 = vunpack.c.l.b16 %v707
        %v1003 = vunpack.c.l.b16 %v708
        %v1004 = vunpack.c.l.b16 %v709
        %v1005 = vunpack.c.l.b16 %v710
        %v1006 = vunpack.c.l.b16 %v711
        %v1007 = vunpack.c.l.b16 %v712
        %v1008 = vunpack.c.l.b16 %v713
        %v1009 = vunpack.c.l.b16 %v714
        %v1010 = vunpack.c.l.b16 %v715
        %v1011 = vunpack.c.l.b16 %v716
        %v1012 = vunpack.c.l.b16 %v717
        %v1013 = vunpack.c.l.b16 %v718
        %v1014 = vunpack.c.l.b16 %v719
        %v1015 = vunpack.c.l.b16 %v720
        %v1016 = vunpack.c.l.b16 %v721
        %v1017 = vunpack.c.l.b16 %v722
        %v1018 = vunpack.c.l.b16 %v723
        %v1019 = vunpack.c.l.b16 %v724
        %v1020 = vunpack.c.l.b16 %v725
        %v1021 = vunpack.c.l.b16 %v726
        %v1022 = vunpack.c.l.b16 %v727
        %v1023 = vunpack.c.l.b16 %v728
        %v1024 = vunpack.c.l.b16 %v729
        %v1025 = vunpack.c.l.b16 %v730
        %v1026 = vunpack.c.l.b16 %v731
        %v1027 = vunpack.c.l.b16 %v732
        %v1028 = vunpack.c.l.b16 %v733
        %v1029 = vunpack.c.l.b16 %v734
        %v1030 = vpack.c.b16 %v887, %v886
        %v1031 = vpack.c.b16 %v889, %v888
        %v1032 = vpack.c.b16 %v891, %v890
        %v1033 = vpack.c.b16 %v893, %v892
        %v1034 = vpack.c.b16 %v895, %v894
        %v1035 = vpack.c.b16 %v897, %v896
        %v1036 = vpack.c.b16 %v899, %v898
        %v1037 = vpack.c.b16 %v901, %v900
        %v1038 = vpack.c.b16 %v903, %v902
        %v1039 = vpack.c.b16 %v905, %v904
        %v1040 = vpack.c.b16 %v907, %v906
        %v1041 = vpack.c.b16 %v909, %v908
        %v1042 = vpack.c.b16 %v911, %v910
        %v1043 = vpack.c.b16 %v913, %v912
        %v1044 = vpack.c.b16 %v915, %v914
        %v1045 = vpack.c.b16 %v917, %v916
        %v1046 = vpack.c.b16 %v919, %v918
        %v1047 = vpack.c.b16 %v921, %v920
        %v1048 = vpack.c.b16 %v923, %v922
        %v1049 = vpack.c.b16 %v925, %v924
        %v1050 = vpack.c.b16 %v927, %v926
        %v1051 = vpack.c.b16 %v929, %v928
        %v1052 = vpack.c.b16 %v931, %v930
        %v1053 = vpack.c.b16 %v933, %v932
        %v1054 = vpack.c.b16 %v935, %v934
        %v1055 = vpack.c.b16 %v937, %v936
        %v1056 = vpack.c.b16 %v939, %v938
        %v1057 = vpack.c.b16 %v941, %v940
        %v1058 = vpack.c.b16 %v943, %v942
        %v1059 = vpack.c.b16 %v945, %v944
        %v1060 = vpack.c.b16 %v947, %v946
        %v1061 = vpack.c.b16 %v949, %v948
        %v1062 = vpack.c.b16 %v951, %v950
        %v1063 = vpack.c.b16 %v953, %v952
        %v1064 = vpack.c.b16 %v955, %v954
        %v1065 = vpack.c.b16 %v957, %v956
        %v1066 = vpack.c.b16 %v959, %v958
        %v1067 = vpack.c.b16 %v961, %v960
        %v1068 = vpack.c.b16 %v963, %v962
        %v1069 = vpack.c.b16 %v965, %v964
        %v1070 = vpack.c.b16 %v967, %v966
        %v1071 = vpack.c.b16 %v969, %v968
        %v1072 = vpack.c.b16 %v971, %v970
        %v1073 = vpack.c.b16 %v973, %v972
        %v1074 = vpack.c.b16 %v975, %v974
        %v1075 = vpack.c.b16 %v977, %v976
        %v1076 = vpack.c.b16 %v979, %v978
        %v1077 = vpack.c.b16 %v981, %v980
        %v1078 = vpack.c.b16 %v983, %v982
        %v1079 = vpack.c.b16 %v985, %v984
        %v1080 = vpack.c.b16 %v987, %v986
        %v1081 = vpack.c.b16 %v989, %v988
        %v1082 = vpack.c.b16 %v991, %v990
        %v1083 = vpack.c.b16 %v993, %v992
        %v1084 = vpack.c.b16 %v995, %v994
        %v1085 = vpack.c.b16 %v997, %v996
        %v1086 = vpack.c.b16 %v999, %v998
        %v1087 = vpack.c.b16 %v1001, %v1000
        %v1088 = vpack.c.b16 %v1003, %v1002
        %v1089 = vpack.c.b16 %v1005, %v1004
        %v1090 = vpack.c.b16 %v1007, %v1006
        %v1091 = vpack.c.b16 %v1009, %v1008
        %v1092 = vpack.c.b16 %v1011, %v1010
        %v1093 = vpack.c.b16 %v1013, %v1012
        %v1094 = vpack.c.b16 %v1015, %v1014
        %v1095 = vpack.c.b16 %v1017, %v1016
        %v1096 = vpack.c.b16 %v1019, %v1018
        %v1097 = vpack.c.b16 %v1021, %v1020
        %v1098 = vpack.c.b16 %v1023, %v1022
        %v1099 = vpack.c.b16 %v1025, %v1024
        %v1100 = vpack.c.b16 %v1027, %v1026
        %v1101 = vpack.c.b16 %v1029, %v1028
        %1174 = vmatprep.subr.bf16.mxu0 0
        %1175 = vmatpush1.bf16.msra.mxu0 %v1030
        %1176 = vmatprep.subr.bf16.mxu0 0
        %1177 = vmatpush1.bf16.msra.mxu0 %v1031
        %1178 = vmatprep.subr.bf16.mxu0 0
        %1179 = vmatpush1.bf16.msra.mxu0 %v1032
        %1180 = vmatprep.subr.bf16.mxu0 0
        %1181 = vmatpush1.bf16.msra.mxu0 %v1033
        %1182 = vmatprep.subr.bf16.mxu0 0
        %1183 = vmatpush1.bf16.msra.mxu0 %v1034
        %1184 = vmatprep.subr.bf16.mxu0 0
        %1185 = vmatpush1.bf16.msra.mxu0 %v1035
        %1186 = vmatprep.subr.bf16.mxu0 0
        %1187 = vmatpush1.bf16.msra.mxu0 %v1036
        %1188 = vmatprep.subr.bf16.mxu0 0
        %1189 = vmatpush1.bf16.msra.mxu0 %v1037
        %1190 = vmatprep.subr.bf16.mxu0 0
        %1191 = vmatpush1.bf16.msra.mxu0 %v1038
        %1192 = vmatprep.subr.bf16.mxu0 0
        %1193 = vmatpush1.bf16.msra.mxu0 %v1039
        %1194 = vmatprep.subr.bf16.mxu0 0
        %1195 = vmatpush1.bf16.msra.mxu0 %v1040
        %1196 = vmatprep.subr.bf16.mxu0 0
        %1197 = vmatpush1.bf16.msra.mxu0 %v1041
        %1198 = vmatprep.subr.bf16.mxu0 0
        %1199 = vmatpush1.bf16.msra.mxu0 %v1042
        %1200 = vmatprep.subr.bf16.mxu0 0
        %1201 = vmatpush1.bf16.msra.mxu0 %v1043
        %1202 = vmatprep.subr.bf16.mxu0 0
        %1203 = vmatpush1.bf16.msra.mxu0 %v1044
        %1204 = vmatprep.subr.bf16.mxu0 0
        %1205 = vmatpush1.bf16.msra.mxu0 %v1045
        %1206 = vmatprep.mubr.bf16.mxu0 %v583
        %1207 = vmatmul.mubr.bf16.gmra.mrb[0].mxu0 %v582
        %v1208 = vpop.f32.mrb[0].mxu0
        %v1209 = vadd.f32 %v740, %v1208
        %v1210 = vpop.f32.mrb[0].mxu0
        %v1211 = vpop.f32.mrb[0].mxu0
        %v1212 = vadd.f32 %v740, %v1211
        %v1213 = vpop.f32.mrb[0].mxu0
        %1214 = vdwg.mxu0
        %1215 = vmatprep.subr.bf16.mxu0 0
        %1216 = vmatpush1.bf16.msra.mxu0 %v1046
        %1217 = vmatprep.subr.bf16.mxu0 0
        %1218 = vmatpush1.bf16.msra.mxu0 %v1047
        %1219 = vmatprep.subr.bf16.mxu0 0
        %1220 = vmatpush1.bf16.msra.mxu0 %v1048
        %1221 = vmatprep.subr.bf16.mxu0 0
        %1222 = vmatpush1.bf16.msra.mxu0 %v1049
        %1223 = vmatprep.subr.bf16.mxu0 0
        %1224 = vmatpush1.bf16.msra.mxu0 %v1050
        %1225 = vmatprep.subr.bf16.mxu0 0
        %1226 = vmatpush1.bf16.msra.mxu0 %v1051
        %1227 = vmatprep.subr.bf16.mxu0 0
        %1228 = vmatpush1.bf16.msra.mxu0 %v1052
        %1229 = vmatprep.subr.bf16.mxu0 0
        %1230 = vmatpush1.bf16.msra.mxu0 %v1053
        %1231 = vmatprep.subr.bf16.mxu0 0
        %1232 = vmatpush1.bf16.msra.mxu0 %v1054
        %1233 = vmatprep.subr.bf16.mxu0 0
        %1234 = vmatpush1.bf16.msra.mxu0 %v1055
        %1235 = vmatprep.subr.bf16.mxu0 0
        %1236 = vmatpush1.bf16.msra.mxu0 %v1056
        %1237 = vmatprep.subr.bf16.mxu0 0
        %1238 = vmatpush1.bf16.msra.mxu0 %v1057
        %1239 = vmatprep.subr.bf16.mxu0 0
        %1240 = vmatpush1.bf16.msra.mxu0 %v1058
        %1241 = vmatprep.subr.bf16.mxu0 0
        %1242 = vmatpush1.bf16.msra.mxu0 %v1059
        %1243 = vmatprep.subr.bf16.mxu0 0
        %1244 = vmatpush1.bf16.msra.mxu0 %v1060
        %1245 = vmatprep.subr.bf16.mxu0 0
        %1246 = vmatpush1.bf16.msra.mxu0 %v1061
        %1247 = vmatprep.mubr.bf16.mxu0 %v585
        %1248 = vmatmul.mubr.bf16.gmra.mrb[0].mxu0 %v584
        %v1249 = vpop.f32.mrb[0].mxu0
        %v1250 = vadd.f32 %v1209, %v1249
        %v1251 = vpop.f32.mrb[0].mxu0
        %v1252 = vpop.f32.mrb[0].mxu0
        %v1253 = vadd.f32 %v1212, %v1252
        %v1254 = vpop.f32.mrb[0].mxu0
        %1255 = vdwg.mxu0
        %1256 = vmatprep.subr.bf16.mxu0 0
        %1257 = vmatpush1.bf16.msra.mxu0 %v1062
        %1258 = vmatprep.subr.bf16.mxu0 0
        %1259 = vmatpush1.bf16.msra.mxu0 %v1063
        %1260 = vmatprep.subr.bf16.mxu0 0
        %1261 = vmatpush1.bf16.msra.mxu0 %v1064
        %1262 = vmatprep.subr.bf16.mxu0 0
        %1263 = vmatpush1.bf16.msra.mxu0 %v1065
        %1264 = vmatprep.subr.bf16.mxu0 0
        %1265 = vmatpush1.bf16.msra.mxu0 %v1066
        %1266 = vmatprep.subr.bf16.mxu0 0
        %1267 = vmatpush1.bf16.msra.mxu0 %v1067
        %1268 = vmatprep.subr.bf16.mxu0 0
        %1269 = vmatpush1.bf16.msra.mxu0 %v1068
        %1270 = vmatprep.subr.bf16.mxu0 0
        %1271 = vmatpush1.bf16.msra.mxu0 %v1069
        %1272 = vmatprep.subr.bf16.mxu0 0
        %1273 = vmatpush1.bf16.msra.mxu0 %v1070
        %1274 = vmatprep.subr.bf16.mxu0 0
        %1275 = vmatpush1.bf16.msra.mxu0 %v1071
        %1276 = vmatprep.subr.bf16.mxu0 0
        %1277 = vmatpush1.bf16.msra.mxu0 %v1072
        %1278 = vmatprep.subr.bf16.mxu0 0
        %1279 = vmatpush1.bf16.msra.mxu0 %v1073
        %1280 = vmatprep.subr.bf16.mxu0 0
        %1281 = vmatpush1.bf16.msra.mxu0 %v1074
        %1282 = vmatprep.subr.bf16.mxu0 0
        %1283 = vmatpush1.bf16.msra.mxu0 %v1075
        %1284 = vmatprep.subr.bf16.mxu0 0
        %1285 = vmatpush1.bf16.msra.mxu0 %v1076
        %1286 = vmatprep.subr.bf16.mxu0 0
        %1287 = vmatpush1.bf16.msra.mxu0 %v1077
        %1288 = vmatprep.mubr.bf16.mxu0 %v587
        %1289 = vmatmul.mubr.bf16.gmra.mrb[0].mxu0 %v586
        %v1290 = vpop.f32.mrb[0].mxu0
        %v1291 = vadd.f32 %v1250, %v1290
        %v1292 = vpop.f32.mrb[0].mxu0
        %v1293 = vpop.f32.mrb[0].mxu0
        %v1294 = vadd.f32 %v1253, %v1293
        %v1295 = vpop.f32.mrb[0].mxu0
        %1296 = vdwg.mxu0
        %1297 = vmatprep.subr.bf16.mxu0 0
        %1298 = vmatpush1.bf16.msra.mxu0 %v1078
        %1299 = vmatprep.subr.bf16.mxu0 0
        %1300 = vmatpush1.bf16.msra.mxu0 %v1079
        %1301 = vmatprep.subr.bf16.mxu0 0
        %1302 = vmatpush1.bf16.msra.mxu0 %v1080
        %1303 = vmatprep.subr.bf16.mxu0 0
        %1304 = vmatpush1.bf16.msra.mxu0 %v1081
        %1305 = vmatprep.subr.bf16.mxu0 0
        %1306 = vmatpush1.bf16.msra.mxu0 %v1082
        %1307 = vmatprep.subr.bf16.mxu0 0
        %1308 = vmatpush1.bf16.msra.mxu0 %v1083
        %1309 = vmatprep.subr.bf16.mxu0 0
        %1310 = vmatpush1.bf16.msra.mxu0 %v1084
        %1311 = vmatprep.subr.bf16.mxu0 0
        %1312 = vmatpush1.bf16.msra.mxu0 %v1085
        %1313 = vmatprep.subr.bf16.mxu0 0
        %1314 = vmatpush1.bf16.msra.mxu0 %v1086
        %1315 = vmatprep.subr.bf16.mxu0 0
        %1316 = vmatpush1.bf16.msra.mxu0 %v1087
        %1317 = vmatprep.subr.bf16.mxu0 0
        %1318 = vmatpush1.bf16.msra.mxu0 %v1088
        %1319 = vmatprep.subr.bf16.mxu0 0
        %1320 = vmatpush1.bf16.msra.mxu0 %v1089
        %1321 = vmatprep.subr.bf16.mxu0 0
        %1322 = vmatpush1.bf16.msra.mxu0 %v1090
        %1323 = vmatprep.subr.bf16.mxu0 0
        %1324 = vmatpush1.bf16.msra.mxu0 %v1091
        %1325 = vmatprep.subr.bf16.mxu0 0
        %1326 = vmatpush1.bf16.msra.mxu0 %v1092
        %1327 = vmatprep.subr.bf16.mxu0 0
        %1328 = vmatpush1.bf16.msra.mxu0 %v1093
        %1329 = vmatprep.mubr.bf16.mxu0 %v589
        %1330 = vmatmul.mubr.bf16.gmra.mrb[0].mxu0 %v588
        %v1331 = vpop.f32.mrb[0].mxu0
        %v1332 = vadd.f32 %v1291, %v1331
        %v1333 = vpop.f32.mrb[0].mxu0
        %v1334 = vpop.f32.mrb[0].mxu0
        %v1335 = vadd.f32 %v1294, %v1334
        %v1336 = vpop.f32.mrb[0].mxu0
        %1337 = vdwg.mxu0
        %1338 = vmatprep.subr.bf16.mxu0 0
        %1339 = vmatpush1.bf16.msra.mxu0 %v1094
        %1340 = vmatprep.subr.bf16.mxu0 0
        %1341 = vmatpush1.bf16.msra.mxu0 %v1095
        %1342 = vmatprep.subr.bf16.mxu0 0
        %1343 = vmatpush1.bf16.msra.mxu0 %v1096
        %1344 = vmatprep.subr.bf16.mxu0 0
        %1345 = vmatpush1.bf16.msra.mxu0 %v1097
        %1346 = vmatprep.subr.bf16.mxu0 0
        %1347 = vmatpush1.bf16.msra.mxu0 %v1098
        %1348 = vmatprep.subr.bf16.mxu0 0
        %1349 = vmatpush1.bf16.msra.mxu0 %v1099
        %1350 = vmatprep.subr.bf16.mxu0 0
        %1351 = vmatpush1.bf16.msra.mxu0 %v1100
        %1352 = vmatprep.subr.bf16.mxu0 0
        %1353 = vmatpush1.bf16.msra.mxu0 %v1101
        %1354 = vmatprep.subr.bf16.mxu0 0
        %1355 = vmatpush1.bf16.msra.mxu0 0
        %1356 = vmatprep.subr.bf16.mxu0 0
        %1357 = vmatpush1.bf16.msra.mxu0 0
        %1358 = vmatprep.subr.bf16.mxu0 0
        %1359 = vmatpush1.bf16.msra.mxu0 0
        %1360 = vmatprep.subr.bf16.mxu0 0
        %1361 = vmatpush1.bf16.msra.mxu0 0
        %1362 = vmatprep.subr.bf16.mxu0 0
        %1363 = vmatpush1.bf16.msra.mxu0 0
        %1364 = vmatprep.subr.bf16.mxu0 0
        %1365 = vmatpush1.bf16.msra.mxu0 0
        %1366 = vmatprep.subr.bf16.mxu0 0
        %1367 = vmatpush1.bf16.msra.mxu0 0
        %1368 = vmatprep.subr.bf16.mxu0 0
        %1369 = vmatpush1.bf16.msra.mxu0 0
        %1370 = vmatprep.mubr.bf16.mxu0 0
        %1371 = vmatmul.mubr.bf16.gmra.mrb[0].mxu0 %v590
        %v1372 = vpop.f32.mrb[0].mxu0
        %v1373 = vadd.f32 %v1332, %v1372
        %v1374 = vpop.f32.mrb[0].mxu0
        %v1375 = vpop.f32.mrb[0].mxu0
        %v1376 = vadd.f32 %v1335, %v1375
        %v1377 = vpop.f32.mrb[0].mxu0
        %1378 = vdwg.mxu0
        %s1379 = smul.u32 %s28, 16
        %s1380 = scalar_lea.vmem [#allocation3], %s1379
        %1381 = vst [vmem:[%s1380] sm:$0xff] %v1373
        %1382 = vst [vmem:[%s1380 + $0x8] sm:$0xff] %v1376
        %p1383 = scmp.eq.s32.totalorder %s28, 3
        // Predicated region
        $region97: #{tpu_custom_call.1} parent=59 // pred_check
          %p1384 = pneg %p1383
        $region98: #{tpu_custom_call.1} parent=59 // pred_check_branch
          %1386 = sbr.rel (%p1384) target = $region100
        $region99: #{tpu_custom_call.1} parent=59 // pred_region
          %v1387 = vld [vmem:[#allocation4] sm:$0xff]
          %v1388 = vld [vmem:[#allocation4 + $0x8] sm:$0xff]
          %v1389 = vmul.f32 %v1387, %v1387
          %v1390 = vmul.f32 %v1388, %v1388
          %1391 = vadd.xlane.f32.xlu0 %v1389
          %v1392 = vpop.xlane.xlu0 %1391
          %1393 = vadd.xlane.f32.xlu0 %v1390
          %v1394 = vpop.xlane.xlu0 %1393
          %v1395 = vrcp.pop 128.0
          %v1396 = vmul.f32 %v1392, %v1395
          %v1397 = vmul.f32 %v1394, %v1395
          %v1398 = vadd.f32 %v1396, 1e-08
          %v1399 = vadd.f32 %v1397, 1e-08
          %v1400 = vrsqrt.pop %v1398
          %v1401 = vrsqrt.pop %v1399
          %v1402 = vmul.f32 %v1387, %v1400
          %v1403 = vmul.f32 %v1388, %v1401
          %v1404 = vld [vmem:[%s2] sm:$0xff]
          %v1405 = vld [vmem:[%s2 + $0x8] sm:$0xff]
          %1407 = vset.pattern.permute.xlu0 0
          %1408 = vperm.xlu0 %1407, %v1404
          %v1409 = vpop.permute.xlu0 %1408
          %1412 = vset.pattern.permute.xlu0 0
          %1413 = vperm.xlu0 %1412, %v1405
          %v1414 = vpop.permute.xlu0 %1413
          %v1416 = vadd.f32 %v1402, %v1409
          %v1417 = vadd.f32 %v1403, %v1414
          %v1418 = vld [vmem:[#allocation3] sm:$0xff]
          %v1419 = vld [vmem:[#allocation3 + $0x8] sm:$0xff]
          %s1420 = scalar_lea.vmem [#allocation3], 16
          %v1421 = vld [vmem:[%s1420] sm:$0xff]
          %v1422 = vld [vmem:[%s1420 + $0x8] sm:$0xff]
          %1423 = vadd.xlane.f32.xlu0 %v1416
          %v1424 = vpop.xlane.xlu0 %1423
          %1425 = vadd.xlane.f32.xlu0 %v1417
          %v1426 = vpop.xlane.xlu0 %1425
          %v1427 = vmul.f32 %v1424, %v1395
          %v1428 = vmul.f32 %v1426, %v1395
          %v1429 = vadd.f32 %v1416, %v1417
          %1430 = vadd.xlane.f32.xlu0 %v1429
          %v1431 = vpop.xlane.xlu0 %1430
          %v1432 = vrot.slane %v1431, 4
          %v1433 = vadd.f32 %v1431, %v1432
          %v1434 = vrot.slane %v1433, 2
          %v1435 = vadd.f32 %v1433, %v1434
          %v1436 = vrot.slane %v1435, 1
          %v1437 = vadd.f32 %v1435, %v1436
          %s1438 = vtos %v1437
          %v1439 = vrcp.pop 2048.0
          %s1440 = vtos %v1439
          %s1441 = smul.f32 %s1438, %s1440
          %v1442 = vmul.f32 %v1416, %v1416
          %v1443 = vmul.f32 %v1417, %v1417
          %v1444 = vadd.f32 %v1442, %v1443
          %1445 = vadd.xlane.f32.xlu0 %v1444
          %v1446 = vpop.xlane.xlu0 %1445
          %v1447 = vrot.slane %v1446, 4
          %v1448 = vadd.f32 %v1446, %v1447
          %v1449 = vrot.slane %v1448, 2
          %v1450 = vadd.f32 %v1448, %v1449
          %v1451 = vrot.slane %v1450, 1
          %v1452 = vadd.f32 %v1450, %v1451
          %s1453 = vtos %v1452
          %v1454 = vrcp.pop 2048.0
          %s1455 = vtos %v1454
          %s1456 = smul.f32 %s1453, %s1455
          %s1457 = smul.f32 %s1441, %s1441
          %s1458 = ssub.f32 %s1456, %s1457
          %s1459 = smul.f32 %s1458, 1.0004885
          %v1460 = vstv %s1459
          %v1461 = vrsqrt.pop %v1460
          %s1462 = vtos %v1461
          %v1463 = vsub.f32 %v1416, %v1427
          %v1464 = vsub.f32 %v1417, %v1428
          %v1465 = vstv %s1462
          %v1466 = vmul.f32 %v1463, %v1465
          %v1467 = vmul.f32 %v1464, %v1465
          %v1468 = vmul.f32 %v1418, %v1466
          %v1469 = vmul.f32 %v1419, %v1467
          %v1470 = vadd.f32 %v1468, %v1421
          %v1471 = vadd.f32 %v1469, %v1422
          %v1472 = vld [vmem:[#allocation8] sm:$0xff]
          %v1473 = vld [vmem:[#allocation8 + $0x8] sm:$0xff]
          %v1474 = vld [vmem:[#allocation8 + $0x10] sm:$0xff]
          %v1475 = vld [vmem:[#allocation8 + $0x18] sm:$0xff]
          %v1476 = vld [vmem:[#allocation8 + $0x20] sm:$0xff]
          %v1477 = vld [vmem:[#allocation8 + $0x28] sm:$0xff]
          %v1478 = vld [vmem:[#allocation8 + $0x30] sm:$0xff]
          %v1479 = vld [vmem:[#allocation8 + $0x38] sm:$0xff]
          %v1480 = vld [vmem:[#allocation8 + $0x40] sm:$0xff]
          %v1481 = vld [vmem:[#allocation8 + $0x48] sm:$0xff]
          %v1482 = vld [vmem:[#allocation8 + $0x50] sm:$0xff]
          %v1483 = vld [vmem:[#allocation8 + $0x58] sm:$0xff]
          %v1484 = vld [vmem:[#allocation8 + $0x60] sm:$0xff]
          %v1485 = vld [vmem:[#allocation8 + $0x68] sm:$0xff]
          %v1486 = vld [vmem:[#allocation8 + $0x70] sm:$0xff]
          %v1487 = vld [vmem:[#allocation8 + $0x78] sm:$0xff]
          %v1488 = vld [vmem:[#allocation8 + $0x80] sm:$0xff]
          %v1489 = vld [vmem:[#allocation8 + $0x88] sm:$0xff]
          %v1491 = vrot.slane %v1471, 3
          %vm1494 = vcmask 1044480
          %v1495 = vrot.slane %v1470, 3
          %v1496 = vsel %vm1494, %v1495, %v1491
          %v1499 = vsel %vm1494, %v1491, %v1495
          %v1500 = vrot.slane %v1471, 4
          %vm1502 = vcmask 1043456
          %v1503 = vrot.slane %v1470, 4
          %v1504 = vsel %vm1502, %v1503, %v1500
          %v1507 = vsel %vm1502, %v1500, %v1503
          %v1508 = vrot.slane %v1471, 5
          %vm1510 = vcmask 1042432
          %v1511 = vrot.slane %v1470, 5
          %v1512 = vsel %vm1510, %v1511, %v1508
          %v1515 = vsel %vm1510, %v1508, %v1511
          %v1516 = vrot.slane %v1471, 7
          %vm1518 = vcmask 1040384
          %v1519 = vrot.slane %v1470, 7
          %v1520 = vsel %vm1518, %v1519, %v1516
          %v1523 = vsel %vm1518, %v1516, %v1519
          %vm1524 = vcmask 1046528
          %v1525 = vrot.slane %v1470, 1
          %v1526 = vrot.slane %v1471, 1
          %v1527 = vsel %vm1524, %v1525, %v1526
          %v1531 = vsel %vm1524, %v1526, %v1525
          %v1532 = vmul.f32 %v1499, %v1472
          %v1533 = vmul.f32 %v1507, %v1473
          %v1534 = vmul.f32 %v1515, %v1474
          %v1535 = vmul.f32 %v1523, %v1475
          %v1536 = vmul.f32 %v1470, %v1476
          %v1537 = vmul.f32 %v1527, %v1477
          %v1538 = vmul.f32 %v1496, %v1478
          %v1539 = vmul.f32 %v1504, %v1479
          %v1540 = vmul.f32 %v1512, %v1480
          %v1541 = vmul.f32 %v1496, %v1481
          %v1542 = vmul.f32 %v1504, %v1482
          %v1543 = vmul.f32 %v1512, %v1483
          %v1544 = vmul.f32 %v1520, %v1484
          %v1545 = vmul.f32 %v1471, %v1485
          %v1546 = vmul.f32 %v1531, %v1486
          %v1547 = vmul.f32 %v1499, %v1487
          %v1548 = vmul.f32 %v1507, %v1488
          %v1549 = vmul.f32 %v1515, %v1489
          %v1550 = vpack.c.bf16 %v1541, %v1532
          %v1551 = vpack.c.bf16 %v1542, %v1533
          %v1552 = vpack.c.bf16 %v1543, %v1534
          %v1553 = vpack.c.bf16 %v1544, %v1535
          %v1554 = vpack.c.bf16 %v1545, %v1536
          %v1555 = vpack.c.bf16 %v1546, %v1537
          %v1556 = vpack.c.bf16 %v1547, %v1538
          %v1557 = vpack.c.bf16 %v1548, %v1539
          %v1558 = vpack.c.bf16 %v1549, %v1540
          %v1559 = vld [vmem:[#allocation12] sm:$0xf]
          %v1560 = vld [vmem:[#allocation12 + $0x4] sm:$0xf]
          %v1561 = vld [vmem:[#allocation12 + $0x8] sm:$0xf]
          %v1562 = vld [vmem:[#allocation12 + $0xc] sm:$0xf]
          %v1563 = vld [vmem:[#allocation12 + $0x10] sm:$0xf]
          %v1564 = vld [vmem:[#allocation12 + $0x14] sm:$0xf]
          %v1565 = vld [vmem:[#allocation12 + $0x18] sm:$0xf]
          %v1566 = vld [vmem:[#allocation12 + $0x1c] sm:$0xf]
          %v1567 = vld [vmem:[#allocation12 + $0x20] sm:$0xf]
          %v1568 = vld [vmem:[#allocation12 + $0x24] sm:$0xf]
          %v1569 = vld [vmem:[#allocation12 + $0x28] sm:$0xf]
          %v1570 = vld [vmem:[#allocation12 + $0x2c] sm:$0xf]
          %v1571 = vld [vmem:[#allocation12 + $0x30] sm:$0xf]
          %v1572 = vld [vmem:[#allocation12 + $0x34] sm:$0xf]
          %v1573 = vld [vmem:[#allocation12 + $0x38] sm:$0xf]
          %v1574 = vld [vmem:[#allocation12 + $0x3c] sm:$0xf]
          %v1575 = vld [vmem:[#allocation12 + $0x40] sm:$0xf]
          %v1576 = vld [vmem:[#allocation12 + $0x44] sm:$0xf]
          %v1577 = vld [vmem:[#allocation12 + $0x48] sm:$0xf]
          %v1578 = vld [vmem:[#allocation12 + $0x4c] sm:$0xf]
          %v1579 = vld [vmem:[#allocation12 + $0x50] sm:$0xf]
          %v1580 = vld [vmem:[#allocation12 + $0x54] sm:$0xf]
          %v1581 = vld [vmem:[#allocation12 + $0x58] sm:$0xf]
          %v1582 = vld [vmem:[#allocation12 + $0x5c] sm:$0xf]
          %v1583 = vld [vmem:[#allocation12 + $0x60] sm:$0xf]
          %v1584 = vld [vmem:[#allocation12 + $0x64] sm:$0xf]
          %v1585 = vld [vmem:[#allocation12 + $0x68] sm:$0xf]
          %v1586 = vld [vmem:[#allocation12 + $0x6c] sm:$0xf]
          %v1587 = vld [vmem:[#allocation12 + $0x70] sm:$0xf]
          %v1588 = vld [vmem:[#allocation12 + $0x74] sm:$0xf]
          %v1589 = vld [vmem:[#allocation12 + $0x78] sm:$0xf]
          %v1590 = vld [vmem:[#allocation12 + $0x7c] sm:$0xf]
          %v1591 = vld [vmem:[#allocation12 + $0x80] sm:$0xf]
          %v1592 = vld [vmem:[#allocation12 + $0x84] sm:$0xf]
          %v1593 = vld [vmem:[#allocation12 + $0x88] sm:$0xf]
          %v1594 = vld [vmem:[#allocation12 + $0x8c] sm:$0xf]
          %v1595 = vld [vmem:[#allocation12 + $0x90] sm:$0xf]
          %v1596 = vld [vmem:[#allocation12 + $0x94] sm:$0xf]
          %v1597 = vld [vmem:[#allocation12 + $0x98] sm:$0xf]
          %v1598 = vld [vmem:[#allocation12 + $0x9c] sm:$0xf]
          %v1599 = vld [vmem:[#allocation12 + $0xa0] sm:$0xf]
          %v1600 = vld [vmem:[#allocation12 + $0xa4] sm:$0xf]
          %v1601 = vld [vmem:[#allocation12 + $0xa8] sm:$0xf]
          %v1602 = vld [vmem:[#allocation12 + $0xac] sm:$0xf]
          %v1603 = vld [vmem:[#allocation12 + $0xb0] sm:$0xf]
          %v1604 = vld [vmem:[#allocation12 + $0xb4] sm:$0xf]
          %v1605 = vld [vmem:[#allocation12 + $0xb8] sm:$0xf]
          %v1606 = vld [vmem:[#allocation12 + $0xbc] sm:$0xf]
          %v1607 = vld [vmem:[#allocation12 + $0xc0] sm:$0xf]
          %v1608 = vld [vmem:[#allocation12 + $0xc4] sm:$0xf]
          %v1609 = vld [vmem:[#allocation12 + $0xc8] sm:$0xf]
          %v1610 = vld [vmem:[#allocation12 + $0xcc] sm:$0xf]
          %v1611 = vld [vmem:[#allocation12 + $0xd0] sm:$0xf]
          %v1612 = vld [vmem:[#allocation12 + $0xd4] sm:$0xf]
          %v1613 = vld [vmem:[#allocation12 + $0xd8] sm:$0xf]
          %v1614 = vld [vmem:[#allocation12 + $0xdc] sm:$0xf]
          %v1615 = vld [vmem:[#allocation12 + $0xe0] sm:$0xf]
          %v1616 = vld [vmem:[#allocation12 + $0xe4] sm:$0xf]
          %v1617 = vld [vmem:[#allocation12 + $0xe8] sm:$0xf]
          %v1618 = vld [vmem:[#allocation12 + $0xec] sm:$0xf]
          %v1619 = vld [vmem:[#allocation12 + $0xf0] sm:$0xf]
          %v1620 = vld [vmem:[#allocation12 + $0xf4] sm:$0xf]
          %v1621 = vld [vmem:[#allocation12 + $0xf8] sm:$0xf]
          %v1622 = vld [vmem:[#allocation12 + $0xfc] sm:$0xf]
          %v1623 = vld [vmem:[#allocation12 + $0x100] sm:$0xf]
          %v1624 = vld [vmem:[#allocation12 + $0x104] sm:$0xf]
          %v1625 = vld [vmem:[#allocation12 + $0x108] sm:$0xf]
          %v1626 = vld [vmem:[#allocation12 + $0x10c] sm:$0xf]
          %v1627 = vld [vmem:[#allocation12 + $0x110] sm:$0xf]
          %v1628 = vld [vmem:[#allocation12 + $0x114] sm:$0xf]
          %v1629 = vld [vmem:[#allocation12 + $0x118] sm:$0xf]
          %v1630 = vld [vmem:[#allocation12 + $0x11c] sm:$0xf]
          %v1631 = vld [vmem:[#allocation12 + $0x120] sm:$0xf]
          %v1632 = vld [vmem:[#allocation12 + $0x124] sm:$0xf]
          %v1633 = vld [vmem:[#allocation12 + $0x128] sm:$0xf]
          %v1634 = vld [vmem:[#allocation12 + $0x12c] sm:$0xf]
          %v1635 = vld [vmem:[#allocation12 + $0x130] sm:$0xf]
          %v1636 = vld [vmem:[#allocation12 + $0x134] sm:$0xf]
          %v1637 = vld [vmem:[#allocation12 + $0x138] sm:$0xf]
          %v1638 = vld [vmem:[#allocation12 + $0x13c] sm:$0xf]
          %v1639 = vld [vmem:[#allocation12 + $0x140] sm:$0xf]
          %v1640 = vld [vmem:[#allocation12 + $0x144] sm:$0xf]
          %v1641 = vld [vmem:[#allocation12 + $0x148] sm:$0xf]
          %v1642 = vld [vmem:[#allocation12 + $0x14c] sm:$0xf]
          %v1643 = vld [vmem:[#allocation12 + $0x150] sm:$0xf]
          %v1644 = vld [vmem:[#allocation12 + $0x154] sm:$0xf]
          %v1645 = vld [vmem:[#allocation12 + $0x158] sm:$0xf]
          %v1646 = vld [vmem:[#allocation12 + $0x15c] sm:$0xf]
          %v1647 = vld [vmem:[#allocation12 + $0x160] sm:$0xf]
          %v1648 = vld [vmem:[#allocation12 + $0x164] sm:$0xf]
          %v1649 = vld [vmem:[#allocation12 + $0x168] sm:$0xf]
          %v1650 = vld [vmem:[#allocation12 + $0x16c] sm:$0xf]
          %v1651 = vld [vmem:[#allocation12 + $0x170] sm:$0xf]
          %v1652 = vld [vmem:[#allocation12 + $0x174] sm:$0xf]
          %v1653 = vld [vmem:[#allocation12 + $0x178] sm:$0xf]
          %v1654 = vld [vmem:[#allocation12 + $0x17c] sm:$0xf]
          %v1655 = vld [vmem:[#allocation12 + $0x180] sm:$0xf]
          %v1656 = vld [vmem:[#allocation12 + $0x184] sm:$0xf]
          %v1657 = vld [vmem:[#allocation12 + $0x188] sm:$0xf]
          %v1658 = vld [vmem:[#allocation12 + $0x18c] sm:$0xf]
          %v1659 = vld [vmem:[#allocation12 + $0x190] sm:$0xf]
          %v1660 = vld [vmem:[#allocation12 + $0x194] sm:$0xf]
          %v1661 = vld [vmem:[#allocation12 + $0x198] sm:$0xf]
          %v1662 = vld [vmem:[#allocation12 + $0x19c] sm:$0xf]
          %v1663 = vld [vmem:[#allocation12 + $0x1a0] sm:$0xf]
          %v1664 = vld [vmem:[#allocation12 + $0x1a4] sm:$0xf]
          %v1665 = vld [vmem:[#allocation12 + $0x1a8] sm:$0xf]
          %v1666 = vld [vmem:[#allocation12 + $0x1ac] sm:$0xf]
          %v1667 = vld [vmem:[#allocation12 + $0x1b0] sm:$0xf]
          %v1668 = vld [vmem:[#allocation12 + $0x1b4] sm:$0xf]
          %v1669 = vld [vmem:[#allocation12 + $0x1b8] sm:$0xf]
          %v1670 = vld [vmem:[#allocation12 + $0x1bc] sm:$0xf]
          %v1671 = vld [vmem:[#allocation12 + $0x1c0] sm:$0xf]
          %v1672 = vld [vmem:[#allocation12 + $0x1c4] sm:$0xf]
          %v1673 = vld [vmem:[#allocation12 + $0x1c8] sm:$0xf]
          %v1674 = vld [vmem:[#allocation12 + $0x1cc] sm:$0xf]
          %v1675 = vld [vmem:[#allocation12 + $0x1d0] sm:$0xf]
          %v1676 = vld [vmem:[#allocation12 + $0x1d4] sm:$0xf]
          %v1677 = vld [vmem:[#allocation12 + $0x1d8] sm:$0xf]
          %v1678 = vld [vmem:[#allocation12 + $0x1dc] sm:$0xf]
          %v1679 = vld [vmem:[#allocation12 + $0x1e0] sm:$0xf]
          %v1680 = vld [vmem:[#allocation12 + $0x1e4] sm:$0xf]
          %v1681 = vld [vmem:[#allocation12 + $0x1e8] sm:$0xf]
          %v1682 = vld [vmem:[#allocation12 + $0x1ec] sm:$0xf]
          %v1683 = vld [vmem:[#allocation12 + $0x1f0] sm:$0xf]
          %v1684 = vld [vmem:[#allocation12 + $0x1f4] sm:$0xf]
          %v1685 = vld [vmem:[#allocation12 + $0x1f8] sm:$0xf]
          %v1686 = vld [vmem:[#allocation12 + $0x1fc] sm:$0xf]
          %v1687 = vld [vmem:[#allocation12 + $0x200] sm:$0xf]
          %v1688 = vld [vmem:[#allocation12 + $0x204] sm:$0xf]
          %v1689 = vld [vmem:[#allocation12 + $0x208] sm:$0xf]
          %v1690 = vld [vmem:[#allocation12 + $0x20c] sm:$0xf]
          %v1691 = vld [vmem:[#allocation12 + $0x210] sm:$0xf]
          %v1692 = vld [vmem:[#allocation12 + $0x214] sm:$0xf]
          %v1693 = vld [vmem:[#allocation12 + $0x218] sm:$0xf]
          %v1694 = vld [vmem:[#allocation12 + $0x21c] sm:$0xf]
          %v1695 = vld [vmem:[#allocation12 + $0x220] sm:$0xf]
          %v1696 = vld [vmem:[#allocation12 + $0x224] sm:$0xf]
          %v1697 = vld [vmem:[#allocation12 + $0x228] sm:$0xf]
          %v1698 = vld [vmem:[#allocation12 + $0x22c] sm:$0xf]
          %v1699 = vld [vmem:[#allocation12 + $0x230] sm:$0xf]
          %v1700 = vld [vmem:[#allocation12 + $0x234] sm:$0xf]
          %v1701 = vld [vmem:[#allocation12 + $0x238] sm:$0xf]
          %v1702 = vld [vmem:[#allocation12 + $0x23c] sm:$0xf]
          %v1703 = vld [vmem:[#allocation14] sm:$0x1]
          %v1705 = vlaneseq
          %v1706 = vshrl.u32 %v1705, 7
          %v1707 = vsub.s32 0, %v1706
          %v1708 = vrot.slane %v1703, %v1707
          %v1854 = vunpack.c.l.b16 %v1559
          %v1855 = vunpack.c.l.b16 %v1560
          %v1856 = vunpack.c.l.b16 %v1561
          %v1857 = vunpack.c.l.b16 %v1562
          %v1858 = vunpack.c.l.b16 %v1563
          %v1859 = vunpack.c.l.b16 %v1564
          %v1860 = vunpack.c.l.b16 %v1565
          %v1861 = vunpack.c.l.b16 %v1566
          %v1862 = vunpack.c.l.b16 %v1567
          %v1863 = vunpack.c.l.b16 %v1568
          %v1864 = vunpack.c.l.b16 %v1569
          %v1865 = vunpack.c.l.b16 %v1570
          %v1866 = vunpack.c.l.b16 %v1571
          %v1867 = vunpack.c.l.b16 %v1572
          %v1868 = vunpack.c.l.b16 %v1573
          %v1869 = vunpack.c.l.b16 %v1574
          %v1870 = vunpack.c.l.b16 %v1575
          %v1871 = vunpack.c.l.b16 %v1576
          %v1872 = vunpack.c.l.b16 %v1577
          %v1873 = vunpack.c.l.b16 %v1578
          %v1874 = vunpack.c.l.b16 %v1579
          %v1875 = vunpack.c.l.b16 %v1580
          %v1876 = vunpack.c.l.b16 %v1581
          %v1877 = vunpack.c.l.b16 %v1582
          %v1878 = vunpack.c.l.b16 %v1583
          %v1879 = vunpack.c.l.b16 %v1584
          %v1880 = vunpack.c.l.b16 %v1585
          %v1881 = vunpack.c.l.b16 %v1586
          %v1882 = vunpack.c.l.b16 %v1587
          %v1883 = vunpack.c.l.b16 %v1588
          %v1884 = vunpack.c.l.b16 %v1589
          %v1885 = vunpack.c.l.b16 %v1590
          %v1886 = vunpack.c.l.b16 %v1591
          %v1887 = vunpack.c.l.b16 %v1592
          %v1888 = vunpack.c.l.b16 %v1593
          %v1889 = vunpack.c.l.b16 %v1594
          %v1890 = vunpack.c.l.b16 %v1595
          %v1891 = vunpack.c.l.b16 %v1596
          %v1892 = vunpack.c.l.b16 %v1597
          %v1893 = vunpack.c.l.b16 %v1598
          %v1894 = vunpack.c.l.b16 %v1599
          %v1895 = vunpack.c.l.b16 %v1600
          %v1896 = vunpack.c.l.b16 %v1601
          %v1897 = vunpack.c.l.b16 %v1602
          %v1898 = vunpack.c.l.b16 %v1603
          %v1899 = vunpack.c.l.b16 %v1604
          %v1900 = vunpack.c.l.b16 %v1605
          %v1901 = vunpack.c.l.b16 %v1606
          %v1902 = vunpack.c.l.b16 %v1607
          %v1903 = vunpack.c.l.b16 %v1608
          %v1904 = vunpack.c.l.b16 %v1609
          %v1905 = vunpack.c.l.b16 %v1610
          %v1906 = vunpack.c.l.b16 %v1611
          %v1907 = vunpack.c.l.b16 %v1612
          %v1908 = vunpack.c.l.b16 %v1613
          %v1909 = vunpack.c.l.b16 %v1614
          %v1910 = vunpack.c.l.b16 %v1615
          %v1911 = vunpack.c.l.b16 %v1616
          %v1912 = vunpack.c.l.b16 %v1617
          %v1913 = vunpack.c.l.b16 %v1618
          %v1914 = vunpack.c.l.b16 %v1619
          %v1915 = vunpack.c.l.b16 %v1620
          %v1916 = vunpack.c.l.b16 %v1621
          %v1917 = vunpack.c.l.b16 %v1622
          %v1918 = vunpack.c.l.b16 %v1623
          %v1919 = vunpack.c.l.b16 %v1624
          %v1920 = vunpack.c.l.b16 %v1625
          %v1921 = vunpack.c.l.b16 %v1626
          %v1922 = vunpack.c.l.b16 %v1627
          %v1923 = vunpack.c.l.b16 %v1628
          %v1924 = vunpack.c.l.b16 %v1629
          %v1925 = vunpack.c.l.b16 %v1630
          %v1926 = vunpack.c.l.b16 %v1631
          %v1927 = vunpack.c.l.b16 %v1632
          %v1928 = vunpack.c.l.b16 %v1633
          %v1929 = vunpack.c.l.b16 %v1634
          %v1930 = vunpack.c.l.b16 %v1635
          %v1931 = vunpack.c.l.b16 %v1636
          %v1932 = vunpack.c.l.b16 %v1637
          %v1933 = vunpack.c.l.b16 %v1638
          %v1934 = vunpack.c.l.b16 %v1639
          %v1935 = vunpack.c.l.b16 %v1640
          %v1936 = vunpack.c.l.b16 %v1641
          %v1937 = vunpack.c.l.b16 %v1642
          %v1938 = vunpack.c.l.b16 %v1643
          %v1939 = vunpack.c.l.b16 %v1644
          %v1940 = vunpack.c.l.b16 %v1645
          %v1941 = vunpack.c.l.b16 %v1646
          %v1942 = vunpack.c.l.b16 %v1647
          %v1943 = vunpack.c.l.b16 %v1648
          %v1944 = vunpack.c.l.b16 %v1649
          %v1945 = vunpack.c.l.b16 %v1650
          %v1946 = vunpack.c.l.b16 %v1651
          %v1947 = vunpack.c.l.b16 %v1652
          %v1948 = vunpack.c.l.b16 %v1653
          %v1949 = vunpack.c.l.b16 %v1654
          %v1950 = vunpack.c.l.b16 %v1655
          %v1951 = vunpack.c.l.b16 %v1656
          %v1952 = vunpack.c.l.b16 %v1657
          %v1953 = vunpack.c.l.b16 %v1658
          %v1954 = vunpack.c.l.b16 %v1659
          %v1955 = vunpack.c.l.b16 %v1660
          %v1956 = vunpack.c.l.b16 %v1661
          %v1957 = vunpack.c.l.b16 %v1662
          %v1958 = vunpack.c.l.b16 %v1663
          %v1959 = vunpack.c.l.b16 %v1664
          %v1960 = vunpack.c.l.b16 %v1665
          %v1961 = vunpack.c.l.b16 %v1666
          %v1962 = vunpack.c.l.b16 %v1667
          %v1963 = vunpack.c.l.b16 %v1668
          %v1964 = vunpack.c.l.b16 %v1669
          %v1965 = vunpack.c.l.b16 %v1670
          %v1966 = vunpack.c.l.b16 %v1671
          %v1967 = vunpack.c.l.b16 %v1672
          %v1968 = vunpack.c.l.b16 %v1673
          %v1969 = vunpack.c.l.b16 %v1674
          %v1970 = vunpack.c.l.b16 %v1675
          %v1971 = vunpack.c.l.b16 %v1676
          %v1972 = vunpack.c.l.b16 %v1677
          %v1973 = vunpack.c.l.b16 %v1678
          %v1974 = vunpack.c.l.b16 %v1679
          %v1975 = vunpack.c.l.b16 %v1680
          %v1976 = vunpack.c.l.b16 %v1681
          %v1977 = vunpack.c.l.b16 %v1682
          %v1978 = vunpack.c.l.b16 %v1683
          %v1979 = vunpack.c.l.b16 %v1684
          %v1980 = vunpack.c.l.b16 %v1685
          %v1981 = vunpack.c.l.b16 %v1686
          %v1982 = vunpack.c.l.b16 %v1687
          %v1983 = vunpack.c.l.b16 %v1688
          %v1984 = vunpack.c.l.b16 %v1689
          %v1985 = vunpack.c.l.b16 %v1690
          %v1986 = vunpack.c.l.b16 %v1691
          %v1987 = vunpack.c.l.b16 %v1692
          %v1988 = vunpack.c.l.b16 %v1693
          %v1989 = vunpack.c.l.b16 %v1694
          %v1990 = vunpack.c.l.b16 %v1695
          %v1991 = vunpack.c.l.b16 %v1696
          %v1992 = vunpack.c.l.b16 %v1697
          %v1993 = vunpack.c.l.b16 %v1698
          %v1994 = vunpack.c.l.b16 %v1699
          %v1995 = vunpack.c.l.b16 %v1700
          %v1996 = vunpack.c.l.b16 %v1701
          %v1997 = vunpack.c.l.b16 %v1702
          %v1998 = vpack.c.b16 %v1855, %v1854
          %v1999 = vpack.c.b16 %v1857, %v1856
          %v2000 = vpack.c.b16 %v1859, %v1858
          %v2001 = vpack.c.b16 %v1861, %v1860
          %v2002 = vpack.c.b16 %v1863, %v1862
          %v2003 = vpack.c.b16 %v1865, %v1864
          %v2004 = vpack.c.b16 %v1867, %v1866
          %v2005 = vpack.c.b16 %v1869, %v1868
          %v2006 = vpack.c.b16 %v1871, %v1870
          %v2007 = vpack.c.b16 %v1873, %v1872
          %v2008 = vpack.c.b16 %v1875, %v1874
          %v2009 = vpack.c.b16 %v1877, %v1876
          %v2010 = vpack.c.b16 %v1879, %v1878
          %v2011 = vpack.c.b16 %v1881, %v1880
          %v2012 = vpack.c.b16 %v1883, %v1882
          %v2013 = vpack.c.b16 %v1885, %v1884
          %v2014 = vpack.c.b16 %v1887, %v1886
          %v2015 = vpack.c.b16 %v1889, %v1888
          %v2016 = vpack.c.b16 %v1891, %v1890
          %v2017 = vpack.c.b16 %v1893, %v1892
          %v2018 = vpack.c.b16 %v1895, %v1894
          %v2019 = vpack.c.b16 %v1897, %v1896
          %v2020 = vpack.c.b16 %v1899, %v1898
          %v2021 = vpack.c.b16 %v1901, %v1900
          %v2022 = vpack.c.b16 %v1903, %v1902
          %v2023 = vpack.c.b16 %v1905, %v1904
          %v2024 = vpack.c.b16 %v1907, %v1906
          %v2025 = vpack.c.b16 %v1909, %v1908
          %v2026 = vpack.c.b16 %v1911, %v1910
          %v2027 = vpack.c.b16 %v1913, %v1912
          %v2028 = vpack.c.b16 %v1915, %v1914
          %v2029 = vpack.c.b16 %v1917, %v1916
          %v2030 = vpack.c.b16 %v1919, %v1918
          %v2031 = vpack.c.b16 %v1921, %v1920
          %v2032 = vpack.c.b16 %v1923, %v1922
          %v2033 = vpack.c.b16 %v1925, %v1924
          %v2034 = vpack.c.b16 %v1927, %v1926
          %v2035 = vpack.c.b16 %v1929, %v1928
          %v2036 = vpack.c.b16 %v1931, %v1930
          %v2037 = vpack.c.b16 %v1933, %v1932
          %v2038 = vpack.c.b16 %v1935, %v1934
          %v2039 = vpack.c.b16 %v1937, %v1936
          %v2040 = vpack.c.b16 %v1939, %v1938
          %v2041 = vpack.c.b16 %v1941, %v1940
          %v2042 = vpack.c.b16 %v1943, %v1942
          %v2043 = vpack.c.b16 %v1945, %v1944
          %v2044 = vpack.c.b16 %v1947, %v1946
          %v2045 = vpack.c.b16 %v1949, %v1948
          %v2046 = vpack.c.b16 %v1951, %v1950
          %v2047 = vpack.c.b16 %v1953, %v1952
          %v2048 = vpack.c.b16 %v1955, %v1954
          %v2049 = vpack.c.b16 %v1957, %v1956
          %v2050 = vpack.c.b16 %v1959, %v1958
          %v2051 = vpack.c.b16 %v1961, %v1960
          %v2052 = vpack.c.b16 %v1963, %v1962
          %v2053 = vpack.c.b16 %v1965, %v1964
          %v2054 = vpack.c.b16 %v1967, %v1966
          %v2055 = vpack.c.b16 %v1969, %v1968
          %v2056 = vpack.c.b16 %v1971, %v1970
          %v2057 = vpack.c.b16 %v1973, %v1972
          %v2058 = vpack.c.b16 %v1975, %v1974
          %v2059 = vpack.c.b16 %v1977, %v1976
          %v2060 = vpack.c.b16 %v1979, %v1978
          %v2061 = vpack.c.b16 %v1981, %v1980
          %v2062 = vpack.c.b16 %v1983, %v1982
          %v2063 = vpack.c.b16 %v1985, %v1984
          %v2064 = vpack.c.b16 %v1987, %v1986
          %v2065 = vpack.c.b16 %v1989, %v1988
          %v2066 = vpack.c.b16 %v1991, %v1990
          %v2067 = vpack.c.b16 %v1993, %v1992
          %v2068 = vpack.c.b16 %v1995, %v1994
          %v2069 = vpack.c.b16 %v1997, %v1996
          %2142 = vmatprep.subr.bf16.mxu0 0
          %2143 = vmatpush1.bf16.msra.mxu0 %v1998
          %2144 = vmatprep.subr.bf16.mxu0 0
          %2145 = vmatpush1.bf16.msra.mxu0 %v1999
          %2146 = vmatprep.subr.bf16.mxu0 0
          %2147 = vmatpush1.bf16.msra.mxu0 %v2000
          %2148 = vmatprep.subr.bf16.mxu0 0
          %2149 = vmatpush1.bf16.msra.mxu0 %v2001
          %2150 = vmatprep.subr.bf16.mxu0 0
          %2151 = vmatpush1.bf16.msra.mxu0 %v2002
          %2152 = vmatprep.subr.bf16.mxu0 0
          %2153 = vmatpush1.bf16.msra.mxu0 %v2003
          %2154 = vmatprep.subr.bf16.mxu0 0
          %2155 = vmatpush1.bf16.msra.mxu0 %v2004
          %2156 = vmatprep.subr.bf16.mxu0 0
          %2157 = vmatpush1.bf16.msra.mxu0 %v2005
          %2158 = vmatprep.subr.bf16.mxu0 0
          %2159 = vmatpush1.bf16.msra.mxu0 %v2006
          %2160 = vmatprep.subr.bf16.mxu0 0
          %2161 = vmatpush1.bf16.msra.mxu0 %v2007
          %2162 = vmatprep.subr.bf16.mxu0 0
          %2163 = vmatpush1.bf16.msra.mxu0 %v2008
          %2164 = vmatprep.subr.bf16.mxu0 0
          %2165 = vmatpush1.bf16.msra.mxu0 %v2009
          %2166 = vmatprep.subr.bf16.mxu0 0
          %2167 = vmatpush1.bf16.msra.mxu0 %v2010
          %2168 = vmatprep.subr.bf16.mxu0 0
          %2169 = vmatpush1.bf16.msra.mxu0 %v2011
          %2170 = vmatprep.subr.bf16.mxu0 0
          %2171 = vmatpush1.bf16.msra.mxu0 %v2012
          %2172 = vmatprep.subr.bf16.mxu0 0
          %2173 = vmatpush1.bf16.msra.mxu0 %v2013
          %2174 = vmatprep.mubr.bf16.mxu0 %v1551
          %2175 = vmatmul.mubr.bf16.gmra.mrb[0].mxu0 %v1550
          %v2176 = vpop.f32.mrb[0].mxu0
          %v2177 = vadd.f32 %v1708, %v2176
          %v2178 = vpop.f32.mrb[0].mxu0
          %v2179 = vpop.f32.mrb[0].mxu0
          %v2180 = vadd.f32 %v1708, %v2179
          %v2181 = vpop.f32.mrb[0].mxu0
          %2182 = vdwg.mxu0
          %2183 = vmatprep.subr.bf16.mxu0 0
          %2184 = vmatpush1.bf16.msra.mxu0 %v2014
          %2185 = vmatprep.subr.bf16.mxu0 0
          %2186 = vmatpush1.bf16.msra.mxu0 %v2015
          %2187 = vmatprep.subr.bf16.mxu0 0
          %2188 = vmatpush1.bf16.msra.mxu0 %v2016
          %2189 = vmatprep.subr.bf16.mxu0 0
          %2190 = vmatpush1.bf16.msra.mxu0 %v2017
          %2191 = vmatprep.subr.bf16.mxu0 0
          %2192 = vmatpush1.bf16.msra.mxu0 %v2018
          %2193 = vmatprep.subr.bf16.mxu0 0
          %2194 = vmatpush1.bf16.msra.mxu0 %v2019
          %2195 = vmatprep.subr.bf16.mxu0 0
          %2196 = vmatpush1.bf16.msra.mxu0 %v2020
          %2197 = vmatprep.subr.bf16.mxu0 0
          %2198 = vmatpush1.bf16.msra.mxu0 %v2021
          %2199 = vmatprep.subr.bf16.mxu0 0
          %2200 = vmatpush1.bf16.msra.mxu0 %v2022
          %2201 = vmatprep.subr.bf16.mxu0 0
          %2202 = vmatpush1.bf16.msra.mxu0 %v2023
          %2203 = vmatprep.subr.bf16.mxu0 0
          %2204 = vmatpush1.bf16.msra.mxu0 %v2024
          %2205 = vmatprep.subr.bf16.mxu0 0
          %2206 = vmatpush1.bf16.msra.mxu0 %v2025
          %2207 = vmatprep.subr.bf16.mxu0 0
          %2208 = vmatpush1.bf16.msra.mxu0 %v2026
          %2209 = vmatprep.subr.bf16.mxu0 0
          %2210 = vmatpush1.bf16.msra.mxu0 %v2027
          %2211 = vmatprep.subr.bf16.mxu0 0
          %2212 = vmatpush1.bf16.msra.mxu0 %v2028
          %2213 = vmatprep.subr.bf16.mxu0 0
          %2214 = vmatpush1.bf16.msra.mxu0 %v2029
          %2215 = vmatprep.mubr.bf16.mxu0 %v1553
          %2216 = vmatmul.mubr.bf16.gmra.mrb[0].mxu0 %v1552
          %v2217 = vpop.f32.mrb[0].mxu0
          %v2218 = vadd.f32 %v2177, %v2217
          %v2219 = vpop.f32.mrb[0].mxu0
          %v2220 = vpop.f32.mrb[0].mxu0
          %v2221 = vadd.f32 %v2180, %v2220
          %v2222 = vpop.f32.mrb[0].mxu0
          %2223 = vdwg.mxu0
          %2224 = vmatprep.subr.bf16.mxu0 0
          %2225 = vmatpush1.bf16.msra.mxu0 %v2030
          %2226 = vmatprep.subr.bf16.mxu0 0
          %2227 = vmatpush1.bf16.msra.mxu0 %v2031
          %2228 = vmatprep.subr.bf16.mxu0 0
          %2229 = vmatpush1.bf16.msra.mxu0 %v2032
          %2230 = vmatprep.subr.bf16.mxu0 0
          %2231 = vmatpush1.bf16.msra.mxu0 %v2033
          %2232 = vmatprep.subr.bf16.mxu0 0
          %2233 = vmatpush1.bf16.msra.mxu0 %v2034
          %2234 = vmatprep.subr.bf16.mxu0 0
          %2235 = vmatpush1.bf16.msra.mxu0 %v2035
          %2236 = vmatprep.subr.bf16.mxu0 0
          %2237 = vmatpush1.bf16.msra.mxu0 %v2036
          %2238 = vmatprep.subr.bf16.mxu0 0
          %2239 = vmatpush1.bf16.msra.mxu0 %v2037
          %2240 = vmatprep.subr.bf16.mxu0 0
          %2241 = vmatpush1.bf16.msra.mxu0 %v2038
          %2242 = vmatprep.subr.bf16.mxu0 0
          %2243 = vmatpush1.bf16.msra.mxu0 %v2039
          %2244 = vmatprep.subr.bf16.mxu0 0
          %2245 = vmatpush1.bf16.msra.mxu0 %v2040
          %2246 = vmatprep.subr.bf16.mxu0 0
          %2247 = vmatpush1.bf16.msra.mxu0 %v2041
          %2248 = vmatprep.subr.bf16.mxu0 0
          %2249 = vmatpush1.bf16.msra.mxu0 %v2042
          %2250 = vmatprep.subr.bf16.mxu0 0
          %2251 = vmatpush1.bf16.msra.mxu0 %v2043
          %2252 = vmatprep.subr.bf16.mxu0 0
          %2253 = vmatpush1.bf16.msra.mxu0 %v2044
          %2254 = vmatprep.subr.bf16.mxu0 0
          %2255 = vmatpush1.bf16.msra.mxu0 %v2045
          %2256 = vmatprep.mubr.bf16.mxu0 %v1555
          %2257 = vmatmul.mubr.bf16.gmra.mrb[0].mxu0 %v1554
          %v2258 = vpop.f32.mrb[0].mxu0
          %v2259 = vadd.f32 %v2218, %v2258
          %v2260 = vpop.f32.mrb[0].mxu0
          %v2261 = vpop.f32.mrb[0].mxu0
          %v2262 = vadd.f32 %v2221, %v2261
          %v2263 = vpop.f32.mrb[0].mxu0
          %2264 = vdwg.mxu0
          %2265 = vmatprep.subr.bf16.mxu0 0
          %2266 = vmatpush1.bf16.msra.mxu0 %v2046
          %2267 = vmatprep.subr.bf16.mxu0 0
          %2268 = vmatpush1.bf16.msra.mxu0 %v2047
          %2269 = vmatprep.subr.bf16.mxu0 0
          %2270 = vmatpush1.bf16.msra.mxu0 %v2048
          %2271 = vmatprep.subr.bf16.mxu0 0
          %2272 = vmatpush1.bf16.msra.mxu0 %v2049
          %2273 = vmatprep.subr.bf16.mxu0 0
          %2274 = vmatpush1.bf16.msra.mxu0 %v2050
          %2275 = vmatprep.subr.bf16.mxu0 0
          %2276 = vmatpush1.bf16.msra.mxu0 %v2051
          %2277 = vmatprep.subr.bf16.mxu0 0
          %2278 = vmatpush1.bf16.msra.mxu0 %v2052
          %2279 = vmatprep.subr.bf16.mxu0 0
          %2280 = vmatpush1.bf16.msra.mxu0 %v2053
          %2281 = vmatprep.subr.bf16.mxu0 0
          %2282 = vmatpush1.bf16.msra.mxu0 %v2054
          %2283 = vmatprep.subr.bf16.mxu0 0
          %2284 = vmatpush1.bf16.msra.mxu0 %v2055
          %2285 = vmatprep.subr.bf16.mxu0 0
          %2286 = vmatpush1.bf16.msra.mxu0 %v2056
          %2287 = vmatprep.subr.bf16.mxu0 0
          %2288 = vmatpush1.bf16.msra.mxu0 %v2057
          %2289 = vmatprep.subr.bf16.mxu0 0
          %2290 = vmatpush1.bf16.msra.mxu0 %v2058
          %2291 = vmatprep.subr.bf16.mxu0 0
          %2292 = vmatpush1.bf16.msra.mxu0 %v2059
          %2293 = vmatprep.subr.bf16.mxu0 0
          %2294 = vmatpush1.bf16.msra.mxu0 %v2060
          %2295 = vmatprep.subr.bf16.mxu0 0
          %2296 = vmatpush1.bf16.msra.mxu0 %v2061
          %2297 = vmatprep.mubr.bf16.mxu0 %v1557
          %2298 = vmatmul.mubr.bf16.gmra.mrb[0].mxu0 %v1556
          %v2299 = vpop.f32.mrb[0].mxu0
          %v2300 = vadd.f32 %v2259, %v2299
          %v2301 = vpop.f32.mrb[0].mxu0
          %v2302 = vpop.f32.mrb[0].mxu0
          %v2303 = vadd.f32 %v2262, %v2302
          %v2304 = vpop.f32.mrb[0].mxu0
          %2305 = vdwg.mxu0
          %2306 = vmatprep.subr.bf16.mxu0 0
          %2307 = vmatpush1.bf16.msra.mxu0 %v2062
          %2308 = vmatprep.subr.bf16.mxu0 0
          %2309 = vmatpush1.bf16.msra.mxu0 %v2063
          %2310 = vmatprep.subr.bf16.mxu0 0
          %2311 = vmatpush1.bf16.msra.mxu0 %v2064
          %2312 = vmatprep.subr.bf16.mxu0 0
          %2313 = vmatpush1.bf16.msra.mxu0 %v2065
          %2314 = vmatprep.subr.bf16.mxu0 0
          %2315 = vmatpush1.bf16.msra.mxu0 %v2066
          %2316 = vmatprep.subr.bf16.mxu0 0
          %2317 = vmatpush1.bf16.msra.mxu0 %v2067
          %2318 = vmatprep.subr.bf16.mxu0 0
          %2319 = vmatpush1.bf16.msra.mxu0 %v2068
          %2320 = vmatprep.subr.bf16.mxu0 0
          %2321 = vmatpush1.bf16.msra.mxu0 %v2069
          %2322 = vmatprep.subr.bf16.mxu0 0
          %2323 = vmatpush1.bf16.msra.mxu0 0
          %2324 = vmatprep.subr.bf16.mxu0 0
          %2325 = vmatpush1.bf16.msra.mxu0 0
          %2326 = vmatprep.subr.bf16.mxu0 0
          %2327 = vmatpush1.bf16.msra.mxu0 0
          %2328 = vmatprep.subr.bf16.mxu0 0
          %2329 = vmatpush1.bf16.msra.mxu0 0
          %2330 = vmatprep.subr.bf16.mxu0 0
          %2331 = vmatpush1.bf16.msra.mxu0 0
          %2332 = vmatprep.subr.bf16.mxu0 0
          %2333 = vmatpush1.bf16.msra.mxu0 0
          %2334 = vmatprep.subr.bf16.mxu0 0
          %2335 = vmatpush1.bf16.msra.mxu0 0
          %2336 = vmatprep.subr.bf16.mxu0 0
          %2337 = vmatpush1.bf16.msra.mxu0 0
          %2338 = vmatprep.mubr.bf16.mxu0 0
          %2339 = vmatmul.mubr.bf16.gmra.mrb[0].mxu0 %v1558
          %v2340 = vpop.f32.mrb[0].mxu0
          %v2341 = vadd.f32 %v2300, %v2340
          %v2342 = vpop.f32.mrb[0].mxu0
          %v2343 = vpop.f32.mrb[0].mxu0
          %v2344 = vadd.f32 %v2303, %v2343
          %v2345 = vpop.f32.mrb[0].mxu0
          %2346 = vdwg.mxu0
          %v2347 = vmul.f32 %v2341, 0.01
          %v2348 = vmul.f32 %v2344, 0.01
          %v2349 = vmax.f32 %v2341, %v2347
          %v2350 = vmax.f32 %v2344, %v2348
          %s2351 = scalar_lea.vmem [#allocation3], 32
          %v2352 = vld [vmem:[%s2351] sm:$0xff]
          %v2353 = vld [vmem:[%s2351 + $0x8] sm:$0xff]
          %s2354 = scalar_lea.vmem [#allocation3], 48
          %v2355 = vld [vmem:[%s2354] sm:$0xff]
          %v2356 = vld [vmem:[%s2354 + $0x8] sm:$0xff]
          %2357 = vadd.xlane.f32.xlu0 %v2349
          %v2358 = vpop.xlane.xlu0 %2357
          %2359 = vadd.xlane.f32.xlu0 %v2350
          %v2360 = vpop.xlane.xlu0 %2359
          %v2361 = vmul.f32 %v2358, %v1395
          %v2362 = vmul.f32 %v2360, %v1395
          %v2363 = vadd.f32 %v2349, %v2350
          %2364 = vadd.xlane.f32.xlu0 %v2363
          %v2365 = vpop.xlane.xlu0 %2364
          %v2366 = vrot.slane %v2365, 4
          %v2367 = vadd.f32 %v2365, %v2366
          %v2368 = vrot.slane %v2367, 2
          %v2369 = vadd.f32 %v2367, %v2368
          %v2370 = vrot.slane %v2369, 1
          %v2371 = vadd.f32 %v2369, %v2370
          %s2372 = vtos %v2371
          %v2373 = vrcp.pop 2048.0
          %s2374 = vtos %v2373
          %s2375 = smul.f32 %s2372, %s2374
          %v2376 = vmul.f32 %v2349, %v2349
          %v2377 = vmul.f32 %v2350, %v2350
          %v2378 = vadd.f32 %v2376, %v2377
          %2379 = vadd.xlane.f32.xlu0 %v2378
          %v2380 = vpop.xlane.xlu0 %2379
          %v2381 = vrot.slane %v2380, 4
          %v2382 = vadd.f32 %v2380, %v2381
          %v2383 = vrot.slane %v2382, 2
          %v2384 = vadd.f32 %v2382, %v2383
          %v2385 = vrot.slane %v2384, 1
          %v2386 = vadd.f32 %v2384, %v2385
          %s2387 = vtos %v2386
          %v2388 = vrcp.pop 2048.0
          %s2389 = vtos %v2388
          %s2390 = smul.f32 %s2387, %s2389
          %s2391 = smul.f32 %s2375, %s2375
          %s2392 = ssub.f32 %s2390, %s2391
          %s2393 = smul.f32 %s2392, 1.0004885
          %v2394 = vstv %s2393
          %v2395 = vrsqrt.pop %v2394
          %s2396 = vtos %v2395
          %v2397 = vsub.f32 %v2349, %v2361
          %v2398 = vsub.f32 %v2350, %v2362
          %v2399 = vstv %s2396
          %v2400 = vmul.f32 %v2397, %v2399
          %v2401 = vmul.f32 %v2398, %v2399
          %v2402 = vmul.f32 %v2352, %v2400
          %v2403 = vmul.f32 %v2353, %v2401
          %v2404 = vadd.f32 %v2402, %v2355
          %v2405 = vadd.f32 %v2403, %v2356
          %v2406 = vpack.c.bf16 %v2405, %v2404
          %v2407 = vld [vmem:[%s8] sm:$0xf]
          %v2408 = vld [vmem:[%s8 + $0x4] sm:$0xf]
          %v2409 = vld [vmem:[%s8 + $0x8] sm:$0xf]
          %v2410 = vld [vmem:[%s8 + $0xc] sm:$0xf]
          %v2411 = vld [vmem:[%s8 + $0x10] sm:$0xf]
          %v2412 = vld [vmem:[%s8 + $0x14] sm:$0xf]
          %v2413 = vld [vmem:[%s8 + $0x18] sm:$0xf]
          %v2414 = vld [vmem:[%s8 + $0x1c] sm:$0xf]
          %v2415 = vld [vmem:[%s8 + $0x20] sm:$0xf]
          %v2416 = vld [vmem:[%s8 + $0x24] sm:$0xf]
          %v2417 = vld [vmem:[%s8 + $0x28] sm:$0xf]
          %v2418 = vld [vmem:[%s8 + $0x2c] sm:$0xf]
          %v2419 = vld [vmem:[%s8 + $0x30] sm:$0xf]
          %v2420 = vld [vmem:[%s8 + $0x34] sm:$0xf]
          %v2421 = vld [vmem:[%s8 + $0x38] sm:$0xf]
          %v2422 = vld [vmem:[%s8 + $0x3c] sm:$0xf]
          %v2423 = vld [vmem:[#allocation15] sm:$0x1]
          %v2425 = vlaneseq
          %v2426 = vshrl.u32 %v2425, 7
          %v2427 = vsub.s32 0, %v2426
          %v2428 = vrot.slane %v2423, %v2427
          %v2446 = vunpack.c.l.b16 %v2407
          %v2447 = vunpack.c.l.b16 %v2408
          %v2448 = vunpack.c.l.b16 %v2409
          %v2449 = vunpack.c.l.b16 %v2410
          %v2450 = vunpack.c.l.b16 %v2411
          %v2451 = vunpack.c.l.b16 %v2412
          %v2452 = vunpack.c.l.b16 %v2413
          %v2453 = vunpack.c.l.b16 %v2414
          %v2454 = vunpack.c.l.b16 %v2415
          %v2455 = vunpack.c.l.b16 %v2416
          %v2456 = vunpack.c.l.b16 %v2417
          %v2457 = vunpack.c.l.b16 %v2418
          %v2458 = vunpack.c.l.b16 %v2419
          %v2459 = vunpack.c.l.b16 %v2420
          %v2460 = vunpack.c.l.b16 %v2421
          %v2461 = vunpack.c.l.b16 %v2422
          %v2462 = vpack.c.b16 %v2447, %v2446
          %v2463 = vpack.c.b16 %v2449, %v2448
          %v2464 = vpack.c.b16 %v2451, %v2450
          %v2465 = vpack.c.b16 %v2453, %v2452
          %v2466 = vpack.c.b16 %v2455, %v2454
          %v2467 = vpack.c.b16 %v2457, %v2456
          %v2468 = vpack.c.b16 %v2459, %v2458
          %v2469 = vpack.c.b16 %v2461, %v2460
          %2478 = vmatprep.subr.bf16.mxu0 0
          %2479 = vmatpush1.bf16.msra.mxu0 %v2462
          %2480 = vmatprep.subr.bf16.mxu0 0
          %2481 = vmatpush1.bf16.msra.mxu0 %v2463
          %2482 = vmatprep.subr.bf16.mxu0 0
          %2483 = vmatpush1.bf16.msra.mxu0 %v2464
          %2484 = vmatprep.subr.bf16.mxu0 0
          %2485 = vmatpush1.bf16.msra.mxu0 %v2465
          %2486 = vmatprep.subr.bf16.mxu0 0
          %2487 = vmatpush1.bf16.msra.mxu0 %v2466
          %2488 = vmatprep.subr.bf16.mxu0 0
          %2489 = vmatpush1.bf16.msra.mxu0 %v2467
          %2490 = vmatprep.subr.bf16.mxu0 0
          %2491 = vmatpush1.bf16.msra.mxu0 %v2468
          %2492 = vmatprep.subr.bf16.mxu0 0
          %2493 = vmatpush1.bf16.msra.mxu0 %v2469
          %2494 = vmatprep.subr.bf16.mxu0 0
          %2495 = vmatpush1.bf16.msra.mxu0 0
          %2496 = vmatprep.subr.bf16.mxu0 0
          %2497 = vmatpush1.bf16.msra.mxu0 0
          %2498 = vmatprep.subr.bf16.mxu0 0
          %2499 = vmatpush1.bf16.msra.mxu0 0
          %2500 = vmatprep.subr.bf16.mxu0 0
          %2501 = vmatpush1.bf16.msra.mxu0 0
          %2502 = vmatprep.subr.bf16.mxu0 0
          %2503 = vmatpush1.bf16.msra.mxu0 0
          %2504 = vmatprep.subr.bf16.mxu0 0
          %2505 = vmatpush1.bf16.msra.mxu0 0
          %2506 = vmatprep.subr.bf16.mxu0 0
          %2507 = vmatpush1.bf16.msra.mxu0 0
          %2508 = vmatprep.subr.bf16.mxu0 0
          %2509 = vmatpush1.bf16.msra.mxu0 0
          %2510 = vmatprep.mubr.bf16.mxu0 0
          %2511 = vmatmul.mubr.bf16.gmra.mrb[0].mxu0 %v2406
          %v2512 = vpop.f32.mrb[0].mxu0
          %v2513 = vadd.f32 %v2428, %v2512
          %v2514 = vpop.f32.mrb[0].mxu0
          %v2515 = vpop.f32.mrb[0].mxu0
          %v2516 = vadd.f32 %v2428, %v2515
          %v2517 = vpop.f32.mrb[0].mxu0
          %2518 = vdwg.mxu0
          %vm2519 = vcmask 23552
          %2520 = vst.msk [vmem:[%s10] sm:$0xff] %vm2519, %v2513
          %2521 = vst.msk [vmem:[%s10 + $0x8] sm:$0xff] %vm2519, %v2516
        $region100: #{tpu_custom_call.1} parent=59 // pred_fallthru
          _
        // Predicated region
        $region101: #{tpu_custom_call.1} parent=59 // pred_check
          %p2522 = pneg %p261
        $region102: #{tpu_custom_call.1} parent=59 // pred_check_branch
          %2524 = sbr.rel (%p2522) target = $region104
        $region103: #{tpu_custom_call.1} parent=59 // pred_region
          _
        $region104: #{tpu_custom_call.1} parent=59 // pred_fallthru
          _
        // Predicated region
        $region105: #{tpu_custom_call.1} parent=59 // pred_check
          %p2525 = pneg %p261
        $region106: #{tpu_custom_call.1} parent=59 // pred_check_branch
          %2527 = sbr.rel (%p2525) target = $region108
        $region107: #{tpu_custom_call.1} parent=59 // pred_region
          _
        $region108: #{tpu_custom_call.1} parent=59 // pred_fallthru
          _
      $region60: #{tpu_custom_call.1} parent=5 // pred_fallthru
        _
      %p2528 = scmp.le.s32.totalorder 2, %s23
      // Predicated region
      $region109: #{tpu_custom_call.1} parent=5 // pred_check
        %p2529 = pneg %p2528
      $region110: #{tpu_custom_call.1} parent=5 // pred_check_branch
        %2531 = sbr.rel (%p2529) target = $region112
      $region111: #{tpu_custom_call.1} parent=5 // pred_region
        %s2532 = ssub.s32 %s23, 2
      $region112: #{tpu_custom_call.1} parent=5 // pred_fallthru
        _
    $region6: #{tpu_custom_call.1} parent=1 // loop_footer
      %s27 = sadd.s32 1, %s23
    $region7: #{tpu_custom_call.1} parent=1 // loop_footer_branch
      %22 = sbr.rel target = $region3
    $region8: #{tpu_custom_call.1} parent=1 // loop_exit
      _
    %2533 = vsyncpa [#allocation5], 1
    %s2534 = scalar_lea.sflag [#allocation5], 1
    %2535 = vsyncpa %s2534, 1
    %2536 = vsyncpa [#allocation7], 1
    %2537 = vsyncpa [#allocation10], 1
    %s2538 = scalar_lea.sflag [#allocation10], 1
    %2539 = vsyncpa %s2538, 1
    %2540 = vsyncpa [#allocation13], 1
    %2541 = vsyncpa [#allocation16], 1

</llo_original>
